<compile_context>
chip_gen: v7x
topology: tpu7x:2x2x1
jax: 0.10.0
libtpu: 0.0.40
codegen_flags: <defaults>
</compile_context>

<pallas_src>
import functools

import jax
import jax.numpy as jnp
from jax.experimental import pallas as pl
from jax.experimental.pallas import tpu as pltpu

EPS = 1e-5
_SQRT1_2 = 0.7071067811865476


def _gelu_exact(x):
    # torch.nn.GELU default: 0.5 * x * (1 + erf(x / sqrt(2))).
    return 0.5 * x * (1.0 + jax.lax.erf(x * _SQRT1_2))


def _make_mixer_kernel(bt, S, C, *, fuse_channel, approx_gelu):
    """Build the fused mixer kernel for static (bt, S, C)."""
    gelu = (lambda x: jax.nn.gelu(x, approximate=True)) if approx_gelu else _gelu_exact

    def kernel(
        x_ref,                                   # (bt, S, C)
        tg_ref, tb_ref,                          # token LN gamma/beta        (S, 1) f32
        tw1_ref, tb1_ref, tw2_ref, tb2_ref,      # token Linear: (S,S) wdt / (S,1) f32, x2
        cg_ref, cb_ref,                          # channel LN gamma/beta      (1, C) f32
        cw1_ref, cb1_ref, cw2_ref, cb2_ref,      # channel Linear: (C,C) wdt / (1,C) f32, x2
        o_ref,                                   # (bt, S, C)
        y_ref,                                   # VMEM scratch (bt, S, C) f32
    ):
        mm_dtype = tw1_ref.dtype
        tw1, tw2 = tw1_ref[...], tw2_ref[...]    # PyTorch (out, in) layout -> W @ h
        # Hoist (S,1)->(S,C) broadcasts above the unrolled per-batch loop
        # (JAX does not CSE broadcast_in_dim; unrolled loops would emit bt copies).
        tg = jnp.broadcast_to(tg_ref[...], (S, C))
        tb = jnp.broadcast_to(tb_ref[...], (S, C))
        tb1 = jnp.broadcast_to(tb1_ref[...], (S, C))
        tb2 = jnp.broadcast_to(tb2_ref[...], (S, C))

        # ---- token-mixing MLP: per batch slab, 2-D, transpose-free ------------------
        for b in range(bt):                      # bt is small & static -> unrolled
            xb = x_ref[b].astype(jnp.float32)    # (S, C)
            # One-pass LayerNorm over the token (sublane) axis: var = E[x^2] - E[x]^2.
            mu = jnp.mean(xb, axis=0, keepdims=True)
            var = jnp.maximum(jnp.mean(xb * xb, axis=0, keepdims=True) - mu * mu, 0.0)
            h = (xb - mu) * jax.lax.rsqrt(var + EPS) * tg + tb           # (S, C)
            # Linear(S,S) in transposed space == W @ h with W in (out, in) layout.
            h1 = gelu(jnp.dot(tw1, h.astype(mm_dtype),
                              preferred_element_type=jnp.float32) + tb1)
            h2 = jnp.dot(tw2, h1.astype(mm_dtype), preferred_element_type=jnp.float32)
            y_ref[b] = h2 + tb2 + xb             # residual; whole-tile aligned store

        # ---- channel-mixing MLP -------------------------------------------------------
        cg, cb = cg_ref[...], cb_ref[...]
        cw1, cw2 = cw1_ref[...], cw2_ref[...]    # (in, out) layout -> h @ W
        cb1, cb2 = cb1_ref[...], cb2_ref[...]

        def channel_mix(y):                      # y: (rows, C) f32
            mu = jnp.mean(y, axis=-1, keepdims=True)
            var = jnp.maximum(jnp.mean(y * y, axis=-1, keepdims=True) - mu * mu, 0.0)
            g = (y - mu) * jax.lax.rsqrt(var + EPS) * cg + cb
            g1 = gelu(jnp.dot(g.astype(mm_dtype), cw1,
                              preferred_element_type=jnp.float32) + cb1)
            g2 = jnp.dot(g1.astype(mm_dtype), cw2,
                         preferred_element_type=jnp.float32) + cb2
            return g2 + y

        if fuse_channel:
            # (bt,S,C) -> (bt*S,C) is a free relayout when S % 8 == 0 (or bt == 1):
            # all bt*S rows go through one MXU matmul.
            y = y_ref[...].reshape(bt * S, C)
            out = channel_mix(y)
            o_ref[...] = out.reshape(bt, S, C).astype(o_ref.dtype)
        else:
            for b in range(bt):
                o_ref[b] = channel_mix(y_ref[b]).astype(o_ref.dtype)

    return kernel


def _tpu_hw_info():
    """(vmem_capacity_bytes, multi_tensorcore_chip) with conservative fallbacks."""
    vmem_cap = 64 << 20          # conservative default (v7x per-TC VMEM)
    multi_tc = True              # conservative default (assume 2 TCs/chip)
    try:
        info = pltpu.get_tpu_info()
        cap = getattr(info, "vmem_capacity_bytes", None)
        if cap:
            vmem_cap = int(cap)
        cores = (getattr(info, "num_tensorcores", None)
                 or getattr(info, "tensorcores_per_chip", None)
                 or getattr(info, "num_cores", None))
        if cores is not None:
            multi_tc = int(cores) >= 2
        else:
            # Heuristic: only v7x exposes <=64 MiB VMEM per TensorCore (and has 2 TCs).
            multi_tc = vmem_cap <= (64 << 20)
    except Exception:
        pass
    return vmem_cap, multi_tc


def _vmem_estimate_bytes(bt, S, C, w_itemsize, io_itemsize, single_buf, fuse_channel):
    """Live VMEM for the scratch-based kernel structure."""
    nbuf = 1 if single_buf else 2
    io = 2 * 2 * bt * S * C * io_itemsize                 # x + out blocks, double-buffered
    scratch = bt * S * C * 4                              # y scratch (f32)
    weights = nbuf * 2 * (S * S + C * C) * w_itemsize     # 2 token + 2 channel matrices
    vectors = nbuf * (4 * S + 8 * C) * 4                  # LN params + biases (padded, approx)
    token_tmp = 8 * S * C * 4                             # per-b temps + 4 hoisted broadcasts
    chan_rows = (bt if fuse_channel else 1) * S
    chan_tmp = 6 * chan_rows * C * 4                      # y/g/g1/g2/out + bf16 casts
    return io + scratch + weights + vectors + token_tmp + chan_tmp + (2 << 20)


def _pick_bt(B, S, C, *, vmem_cap, multi_tc, w_itemsize, io_itemsize, single_buf):
    """Largest batch-block that fits ~0.75*VMEM; on multi-TC chips keep >=2 (prefer even)
    grid steps so the 'parallel' axis feeds both TensorCores."""
    budget = int(0.75 * vmem_cap)
    fuse = (S % 8 == 0)
    divisors = [d for d in range(1, B + 1) if B % d == 0]
    feasible = [d for d in divisors
                if _vmem_estimate_bytes(d, S, C, w_itemsize, io_itemsize, single_buf,
                                        fuse or d == 1) <= budget]
    if not feasible:
        return 1
    if multi_tc and B >= 2:
        even = [d for d in feasible if (B // d) >= 2 and (B // d) % 2 == 0]
        multi = [d for d in feasible if (B // d) >= 2]
        pool = even or multi or feasible
    else:
        pool = feasible
    return max(pool)


@functools.lru_cache(maxsize=1)
def _buffered1_supported():
    """Probe once whether pl.Buffered(1) (single-buffered grid-invariant operands) works
    on this jax/libtpu combination, so the real kernel never needs a broad except."""
    try:
        def k(a_ref, o_ref):
            o_ref[...] = a_ref[...] * 2.0

        x = jnp.arange(8 * 128, dtype=jnp.float32).reshape(8, 128)
        f = pl.pallas_call(
            k,
            out_shape=jax.ShapeDtypeStruct((16, 128), jnp.float32),
            grid=(2,),
            in_specs=[pl.BlockSpec((8, 128), lambda i: (0, 0),
                                   pipeline_mode=pl.Buffered(1))],
            out_specs=pl.BlockSpec((8, 128), lambda i: (i, 0)),
        )
        jax.block_until_ready(f(x))
        return True
    except Exception:
        return False


def mixer_layer(x, params, *, bt=None, matmul_dtype=jnp.bfloat16, approx_gelu=None,
                io_dtype=None, single_buffer_weights=True):
    """x: (B, S, C). params: PyTorch-layout parameters (see init_params).

    matmul_dtype=float32 + approx_gelu=False reproduces the PyTorch forward bit-closely;
    the defaults (bf16 MXU operands, tanh GELU) trade ~5e-2 abs error for speed.
    io_dtype (e.g. jnp.bfloat16) streams x/out at half width on HBM-bound chips (v6e)."""
    B, S, C = x.shape
    wdt = jnp.dtype(matmul_dtype)
    if approx_gelu is None:
        approx_gelu = (wdt == jnp.dtype(jnp.bfloat16))
    if io_dtype is not None:
        x = x.astype(io_dtype)
    io_itemsize = jnp.dtype(x.dtype).itemsize

    vmem_cap, multi_tc = _tpu_hw_info()
    single_buf = bool(single_buffer_weights) and _buffered1_supported()

    if bt is None:
        bt = _pick_bt(B, S, C, vmem_cap=vmem_cap, multi_tc=multi_tc,
                      w_itemsize=wdt.itemsize, io_itemsize=io_itemsize,
                      single_buf=single_buf)
    if B % bt != 0:
        raise ValueError(f"bt={bt} must divide B={B}")

    # Flattened (bt*S, C) channel matmul only when the relayout is free.
    fuse_channel = (S % 8 == 0) or (bt == 1)

    # One-time layout prep outside the kernel (a real model would store weights this way):
    #  - token Linear weights stay in PyTorch (out, in) layout -> kernel computes W @ h.
    #  - channel Linear weights transposed to (in, out)        -> kernel computes h @ W.
    #  - LN params / biases reshaped to broadcast against the kernel's (S, C) tiles.
    #  - matmul weights cast to matmul_dtype (bf16 halves DMA + VMEM); accumulation is f32.
    args = (
        x,
        params["tg"].reshape(S, 1).astype(jnp.float32),
        params["tb"].reshape(S, 1).astype(jnp.float32),
        params["tw1"].astype(wdt),
        params["tb1"].reshape(S, 1).astype(jnp.float32),
        params["tw2"].astype(wdt),
        params["tb2"].reshape(S, 1).astype(jnp.float32),
        params["cg"].reshape(1, C).astype(jnp.float32),
        params["cb"].reshape(1, C).astype(jnp.float32),
        params["cw1"].T.astype(wdt),
        params["cb1"].reshape(1, C).astype(jnp.float32),
        params["cw2"].T.astype(wdt),
        params["cb2"].reshape(1, C).astype(jnp.float32),
    )

    def const_spec(shape):
        index_map = lambda b: (0,) * len(shape)
        if single_buf:
            # Grid-invariant operand: double-buffering buys nothing -> single buffer.
            return pl.BlockSpec(shape, index_map, pipeline_mode=pl.Buffered(1))
        return pl.BlockSpec(shape, index_map)

    in_specs = [
        pl.BlockSpec((bt, S, C), lambda b: (b, 0, 0)),     # x: per-grid-step batch block
        const_spec((S, 1)), const_spec((S, 1)),            # token LN gamma/beta
        const_spec((S, S)), const_spec((S, 1)),            # token W1, b1
        const_spec((S, S)), const_spec((S, 1)),            # token W2, b2
        const_spec((1, C)), const_spec((1, C)),            # channel LN gamma/beta
        const_spec((C, C)), const_spec((1, C)),            # channel W1, b1
        const_spec((C, C)), const_spec((1, C)),            # channel W2, b2
    ]

    est = _vmem_estimate_bytes(bt, S, C, wdt.itemsize, io_itemsize, single_buf, fuse_channel)
    # Lift v5e's 16 MiB default scoped limit; cap at 0.75x physical VMEM per TensorCore
    # (≈96 MiB on v5e/v6e, ≈48 MiB on v7x).
    vmem_limit = int(min(max(est, 32 << 20), max(32 << 20, int(0.75 * vmem_cap))))

    kernel = _make_mixer_kernel(bt, S, C, fuse_channel=fuse_channel, approx_gelu=approx_gelu)

    return pl.pallas_call(
        kernel,
        out_shape=jax.ShapeDtypeStruct((B, S, C), x.dtype),
        grid_spec=pltpu.PrefetchScalarGridSpec(
            num_scalar_prefetch=0,
            grid=(B // bt,),
            in_specs=in_specs,
            out_specs=pl.BlockSpec((bt, S, C), lambda b: (b, 0, 0)),
            scratch_shapes=[pltpu.VMEM((bt, S, C), jnp.float32)],
        ),
        compiler_params=pltpu.CompilerParams(
            dimension_semantics=("parallel",),
            vmem_limit_bytes=vmem_limit,
        ),
    )(*args)


def init_params(key, S, C):
    """Parameters in PyTorch layout/init: Linear weights are (out_features, in_features)."""
    ks = jax.random.split(key, 8)
    bs = 1.0 / jnp.sqrt(S)
    bc = 1.0 / jnp.sqrt(C)
    u = jax.random.uniform
    return {
        # token-mixing LayerNorm(S)
        "tg": jnp.ones((S,), jnp.float32), "tb": jnp.zeros((S,), jnp.float32),
        # token-mixing Linear(S,S) x2
        "tw1": u(ks[0], (S, S), jnp.float32, -bs, bs), "tb1": u(ks[1], (S,), jnp.float32, -bs, bs),
        "tw2": u(ks[2], (S, S), jnp.float32, -bs, bs), "tb2": u(ks[3], (S,), jnp.float32, -bs, bs),
        # channel-mixing LayerNorm(C)
        "cg": jnp.ones((C,), jnp.float32), "cb": jnp.zeros((C,), jnp.float32),
        # channel-mixing Linear(C,C) x2
        "cw1": u(ks[4], (C, C), jnp.float32, -bc, bc), "cb1": u(ks[5], (C,), jnp.float32, -bc, bc),
        "cw2": u(ks[6], (C, C), jnp.float32, -bc, bc), "cb2": u(ks[7], (C,), jnp.float32, -bc, bc),
    }


def _layernorm_lastdim(x, gamma, beta):
    mu = jnp.mean(x, axis=-1, keepdims=True)
    var = jnp.mean((x - mu) ** 2, axis=-1, keepdims=True)
    return (x - mu) * jax.lax.rsqrt(var + EPS) * gamma + beta


def mixer_ref(x, p):
    """Pure-JAX f32 reference implementing the PyTorch module exactly (erf GELU)."""
    xt = jnp.swapaxes(x, 1, 2)                                          # (B, C, S)
    h = _layernorm_lastdim(xt, p["tg"], p["tb"])
    h = _gelu_exact(h @ p["tw1"].T + p["tb1"]) @ p["tw2"].T + p["tb2"]
    y = jnp.swapaxes(h, 1, 2) + x                                       # (B, S, C)
    h = _layernorm_lastdim(y, p["cg"], p["cb"])
    h = _gelu_exact(h @ p["cw1"].T + p["cb1"]) @ p["cw2"].T + p["cb2"]
    return h + y


if __name__ == "__main__":
    B, S, C = 2, 8, 32                       # (batch, tokens, channels)
    key = jax.random.PRNGKey(0)
    kx, kp = jax.random.split(key)
    x = jax.random.normal(kx, (B, S, C), jnp.float32)
    params = init_params(kp, S, C)

    out = jax.block_until_ready(mixer_layer(x, params))
    ref = mixer_ref(x, params)

    assert out.shape == (B, S, C)
    # bf16 MXU operands + tanh GELU vs. the pure-f32 erf reference -> loosened tolerance.
    max_err = float(jnp.max(jnp.abs(out - ref)))
    assert jnp.allclose(out, ref, atol=5e-2, rtol=5e-2), f"mismatch vs reference (max_abs_err={max_err})"
    print("KERNEL_OK")
</pallas_src>

<mosaic_0001>
module attributes {stable_mosaic.version = 11 : i64} {
  func.func @k(%arg0: i32, %arg1: memref<8x128xf32, #tpu.memory_space<vmem>>, %arg2: memref<8x128xf32, #tpu.memory_space<vmem>>) attributes {dimension_semantics = [#tpu.dimension_semantics<arbitrary>], iteration_bounds = array<i64: 2>, scalar_prefetch = 0 : i64, scratch_operands = 0 : i64, tpu.core_type = #tpu.core_type<tc>, window_params = [{pipeline_mode = #tpu.pipeline_mode<synchronous>, transform_indices = @transform_0, window_bounds = array<i64: 8, 128>}, {transform_indices = @transform_1, window_bounds = array<i64: 8, 128>}]} {
    %c0 = arith.constant 0 : index
    %c0_0 = arith.constant 0 : index
    %0 = vector.load %arg1[%c0, %c0_0] : memref<8x128xf32, #tpu.memory_space<vmem>>, vector<8x128xf32>
    %cst = arith.constant 2.000000e+00 : f32
    %1 = vector.broadcast %cst : f32 to vector<8x128xf32>
    %2 = arith.mulf %0, %1 : vector<8x128xf32>
    %c0_1 = arith.constant 0 : index
    %c0_2 = arith.constant 0 : index
    %3 = vector.load %arg2[%c0_1, %c0_2] : memref<8x128xf32, #tpu.memory_space<vmem>>, vector<8x128xf32>
    tpu.vector_store %arg2[%c0_1, %c0_2], %2 {strides = array<i32>} : memref<8x128xf32, #tpu.memory_space<vmem>>, vector<8x128xf32>,
    return
  }
  func.func @transform_0(%arg0: i32) -> (i32, i32) {
    %c0_i32 = arith.constant 0 : i32
    %c0_i32_0 = arith.constant 0 : i32
    %c0_i32_1 = arith.constant 0 : i32
    return %c0_i32, %c0_i32_0 : i32, i32
  }
  func.func @transform_1(%arg0: i32) -> (i32, i32) {
    %c0_i32 = arith.constant 0 : i32
    %c0_i32_0 = arith.constant 0 : i32
    return %arg0, %c0_i32 : i32, i32
  }
}

module attributes {stable_mosaic.version = 11 : i64} {
  func.func @kernel(%arg0: i32, %arg1: memref<1x8x32xf32, #tpu.memory_space<vmem>>, %arg2: memref<8x1xf32, #tpu.memory_space<vmem>>, %arg3: memref<8x1xf32, #tpu.memory_space<vmem>>, %arg4: memref<8x8xbf16, #tpu.memory_space<vmem>>, %arg5: memref<8x1xf32, #tpu.memory_space<vmem>>, %arg6: memref<8x8xbf16, #tpu.memory_space<vmem>>, %arg7: memref<8x1xf32, #tpu.memory_space<vmem>>, %arg8: memref<1x32xf32, #tpu.memory_space<vmem>>, %arg9: memref<1x32xf32, #tpu.memory_space<vmem>>, %arg10: memref<32x32xbf16, #tpu.memory_space<vmem>>, %arg11: memref<1x32xf32, #tpu.memory_space<vmem>>, %arg12: memref<32x32xbf16, #tpu.memory_space<vmem>>, %arg13: memref<1x32xf32, #tpu.memory_space<vmem>>, %arg14: memref<1x8x32xf32, #tpu.memory_space<vmem>>, %arg15: memref<1x8x32xf32, #tpu.memory_space<vmem>>) attributes {dimension_semantics = [#tpu.dimension_semantics<parallel>], iteration_bounds = array<i64: 2>, scalar_prefetch = 0 : i64, scratch_operands = 1 : i64, tpu.core_type = #tpu.core_type<tc>, window_params = [{transform_indices = @transform_0, window_bounds = array<i64: 1, 8, 32>}, {pipeline_mode = #tpu.pipeline_mode<synchronous>, transform_indices = @transform_1, window_bounds = array<i64: 8, 1>}, {pipeline_mode = #tpu.pipeline_mode<synchronous>, transform_indices = @transform_2, window_bounds = array<i64: 8, 1>}, {pipeline_mode = #tpu.pipeline_mode<synchronous>, transform_indices = @transform_3, window_bounds = array<i64: 8, 8>}, {pipeline_mode = #tpu.pipeline_mode<synchronous>, transform_indices = @transform_4, window_bounds = array<i64: 8, 1>}, {pipeline_mode = #tpu.pipeline_mode<synchronous>, transform_indices = @transform_5, window_bounds = array<i64: 8, 8>}, {pipeline_mode = #tpu.pipeline_mode<synchronous>, transform_indices = @transform_6, window_bounds = array<i64: 8, 1>}, {pipeline_mode = #tpu.pipeline_mode<synchronous>, transform_indices = @transform_7, window_bounds = array<i64: 1, 32>}, {pipeline_mode = #tpu.pipeline_mode<synchronous>, transform_indices = @transform_8, window_bounds = array<i64: 1, 32>}, {pipeline_mode = #tpu.pipeline_mode<synchronous>, transform_indices = @transform_9, window_bounds = array<i64: 32, 32>}, {pipeline_mode = #tpu.pipeline_mode<synchronous>, transform_indices = @transform_10, window_bounds = array<i64: 1, 32>}, {pipeline_mode = #tpu.pipeline_mode<synchronous>, transform_indices = @transform_11, window_bounds = array<i64: 32, 32>}, {pipeline_mode = #tpu.pipeline_mode<synchronous>, transform_indices = @transform_12, window_bounds = array<i64: 1, 32>}, {transform_indices = @transform_13, window_bounds = array<i64: 1, 8, 32>}]} {
    %c0 = arith.constant 0 : index
    %c0_0 = arith.constant 0 : index
    %0 = vector.load %arg4[%c0, %c0_0] : memref<8x8xbf16, #tpu.memory_space<vmem>>, vector<8x8xbf16>
    %c0_1 = arith.constant 0 : index
    %c0_2 = arith.constant 0 : index
    %1 = vector.load %arg6[%c0_1, %c0_2] : memref<8x8xbf16, #tpu.memory_space<vmem>>, vector<8x8xbf16>
    %c0_3 = arith.constant 0 : index
    %c0_4 = arith.constant 0 : index
    %2 = vector.load %arg2[%c0_3, %c0_4] : memref<8x1xf32, #tpu.memory_space<vmem>>, vector<8x1xf32>
    %3 = vector.shape_cast %2 : vector<8x1xf32> to vector<8x1xf32>
    %4 = vector.broadcast %3 : vector<8x1xf32> to vector<8x32xf32>
    %c0_5 = arith.constant 0 : index
    %c0_6 = arith.constant 0 : index
    %5 = vector.load %arg3[%c0_5, %c0_6] : memref<8x1xf32, #tpu.memory_space<vmem>>, vector<8x1xf32>
    %6 = vector.shape_cast %5 : vector<8x1xf32> to vector<8x1xf32>
    %7 = vector.broadcast %6 : vector<8x1xf32> to vector<8x32xf32>
    %c0_7 = arith.constant 0 : index
    %c0_8 = arith.constant 0 : index
    %8 = vector.load %arg5[%c0_7, %c0_8] : memref<8x1xf32, #tpu.memory_space<vmem>>, vector<8x1xf32>
    %9 = vector.shape_cast %8 : vector<8x1xf32> to vector<8x1xf32>
    %10 = vector.broadcast %9 : vector<8x1xf32> to vector<8x32xf32>
    %c0_9 = arith.constant 0 : index
    %c0_10 = arith.constant 0 : index
    %11 = vector.load %arg7[%c0_9, %c0_10] : memref<8x1xf32, #tpu.memory_space<vmem>>, vector<8x1xf32>
    %12 = vector.shape_cast %11 : vector<8x1xf32> to vector<8x1xf32>
    %13 = vector.broadcast %12 : vector<8x1xf32> to vector<8x32xf32>
    %c0_11 = arith.constant 0 : index
    %c0_12 = arith.constant 0 : index
    %c0_13 = arith.constant 0 : index
    %14 = vector.load %arg1[%c0_11, %c0_12, %c0_13] : memref<1x8x32xf32, #tpu.memory_space<vmem>>, vector<1x8x32xf32>
    %15 = vector.shape_cast %14 : vector<1x8x32xf32> to vector<8x32xf32>
    %cst = arith.constant dense<0.000000e+00> : vector<32xf32>
    %16 = vector.multi_reduction <add>, %15, %cst [0] : vector<8x32xf32> to vector<32xf32>
    %17 = vector.shape_cast %16 : vector<32xf32> to vector<1x32xf32>
    %cst_14 = arith.constant 8.000000e+00 : f32
    %18 = vector.broadcast %cst_14 : f32 to vector<1x32xf32>
    %19 = arith.divf %17, %18 : vector<1x32xf32>
    %20 = arith.mulf %15, %15 : vector<8x32xf32>
    %cst_15 = arith.constant dense<0.000000e+00> : vector<32xf32>
    %21 = vector.multi_reduction <add>, %20, %cst_15 [0] : vector<8x32xf32> to vector<32xf32>
    %22 = vector.shape_cast %21 : vector<32xf32> to vector<1x32xf32>
    %cst_16 = arith.constant 8.000000e+00 : f32
    %23 = vector.broadcast %cst_16 : f32 to vector<1x32xf32>
    %24 = arith.divf %22, %23 : vector<1x32xf32>
    %25 = arith.mulf %19, %19 : vector<1x32xf32>
    %26 = arith.subf %24, %25 : vector<1x32xf32>
    %cst_17 = arith.constant 0.000000e+00 : f32
    %27 = vector.broadcast %cst_17 : f32 to vector<1x32xf32>
    %28 = arith.maximumf %26, %27 : vector<1x32xf32>
    %29 = vector.broadcast %19 : vector<1x32xf32> to vector<8x32xf32>
    %30 = arith.subf %15, %29 : vector<8x32xf32>
    %cst_18 = arith.constant 9.99999974E-6 : f32
    %31 = vector.broadcast %cst_18 : f32 to vector<1x32xf32>
    %32 = arith.addf %28, %31 : vector<1x32xf32>
    %33 = math.rsqrt %32 : vector<1x32xf32>
    %34 = vector.broadcast %33 : vector<1x32xf32> to vector<8x32xf32>
    %35 = arith.mulf %30, %34 : vector<8x32xf32>
    %36 = arith.mulf %35, %4 : vector<8x32xf32>
    %37 = arith.addf %36, %7 : vector<8x32xf32>
    %38 = arith.truncf %37 : vector<8x32xf32> to vector<8x32xbf16>
    %cst_19 = arith.constant dense<0.000000e+00> : vector<8x32xf32>
    %39 = tpu.matmul %0, %38, %cst_19 {dimension_numbers = #tpu.dot_dimension_numbers<[1], [0], [0], [1], [0, 0, 1, 1], [], []>} : vector<8x8xbf16>, vector<8x32xbf16>, vector<8x32xf32> -> vector<8x32xf32>
    %40 = arith.addf %39, %10 : vector<8x32xf32>
    %41 = arith.mulf %40, %40 : vector<8x32xf32>
    %42 = arith.mulf %40, %41 : vector<8x32xf32>
    %cst_20 = arith.constant 4.471500e-02 : f32
    %43 = vector.broadcast %cst_20 : f32 to vector<8x32xf32>
    %44 = arith.mulf %43, %42 : vector<8x32xf32>
    %45 = arith.addf %40, %44 : vector<8x32xf32>
    %cst_21 = arith.constant 0.797884583 : f32
    %46 = vector.broadcast %cst_21 : f32 to vector<8x32xf32>
    %47 = arith.mulf %46, %45 : vector<8x32xf32>
    %48 = math.tanh %47 : vector<8x32xf32>
    %cst_22 = arith.constant 1.000000e+00 : f32
    %49 = vector.broadcast %cst_22 : f32 to vector<8x32xf32>
    %50 = arith.addf %49, %48 : vector<8x32xf32>
    %cst_23 = arith.constant 5.000000e-01 : f32
    %51 = vector.broadcast %cst_23 : f32 to vector<8x32xf32>
    %52 = arith.mulf %51, %50 : vector<8x32xf32>
    %53 = arith.mulf %40, %52 : vector<8x32xf32>
    %54 = arith.truncf %53 : vector<8x32xf32> to vector<8x32xbf16>
    %cst_24 = arith.constant dense<0.000000e+00> : vector<8x32xf32>
    %55 = tpu.matmul %1, %54, %cst_24 {dimension_numbers = #tpu.dot_dimension_numbers<[1], [0], [0], [1], [0, 0, 1, 1], [], []>} : vector<8x8xbf16>, vector<8x32xbf16>, vector<8x32xf32> -> vector<8x32xf32>
    %56 = arith.addf %55, %13 : vector<8x32xf32>
    %57 = arith.addf %56, %15 : vector<8x32xf32>
    %c0_25 = arith.constant 0 : index
    %c0_26 = arith.constant 0 : index
    %c0_27 = arith.constant 0 : index
    %58 = vector.load %arg15[%c0_25, %c0_26, %c0_27] : memref<1x8x32xf32, #tpu.memory_space<vmem>>, vector<1x8x32xf32>
    %59 = vector.shape_cast %58 : vector<1x8x32xf32> to vector<8x32xf32>
    %60 = vector.shape_cast %57 : vector<8x32xf32> to vector<1x8x32xf32>
    tpu.vector_store %arg15[%c0_25, %c0_26, %c0_27], %60 {strides = array<i32>} : memref<1x8x32xf32, #tpu.memory_space<vmem>>, vector<1x8x32xf32>,
    %c0_28 = arith.constant 0 : index
    %c0_29 = arith.constant 0 : index
    %61 = vector.load %arg8[%c0_28, %c0_29] : memref<1x32xf32, #tpu.memory_space<vmem>>, vector<1x32xf32>
    %c0_30 = arith.constant 0 : index
    %c0_31 = arith.constant 0 : index
    %62 = vector.load %arg9[%c0_30, %c0_31] : memref<1x32xf32, #tpu.memory_space<vmem>>, vector<1x32xf32>
    %c0_32 = arith.constant 0 : index
    %c0_33 = arith.constant 0 : index
    %63 = vector.load %arg10[%c0_32, %c0_33] : memref<32x32xbf16, #tpu.memory_space<vmem>>, vector<32x32xbf16>
    %c0_34 = arith.constant 0 : index
    %c0_35 = arith.constant 0 : index
    %64 = vector.load %arg12[%c0_34, %c0_35] : memref<32x32xbf16, #tpu.memory_space<vmem>>, vector<32x32xbf16>
    %c0_36 = arith.constant 0 : index
    %c0_37 = arith.constant 0 : index
    %65 = vector.load %arg11[%c0_36, %c0_37] : memref<1x32xf32, #tpu.memory_space<vmem>>, vector<1x32xf32>
    %c0_38 = arith.constant 0 : index
    %c0_39 = arith.constant 0 : index
    %66 = vector.load %arg13[%c0_38, %c0_39] : memref<1x32xf32, #tpu.memory_space<vmem>>, vector<1x32xf32>
    %c0_40 = arith.constant 0 : index
    %c0_41 = arith.constant 0 : index
    %c0_42 = arith.constant 0 : index
    %67 = vector.load %arg15[%c0_40, %c0_41, %c0_42] : memref<1x8x32xf32, #tpu.memory_space<vmem>>, vector<1x8x32xf32>
    %68 = vector.shape_cast %67 : vector<1x8x32xf32> to vector<8x32xf32>
    %cst_43 = arith.constant dense<0.000000e+00> : vector<8xf32>
    %69 = vector.multi_reduction <add>, %68, %cst_43 [1] : vector<8x32xf32> to vector<8xf32>
    %70 = vector.shape_cast %69 : vector<8xf32> to vector<8x1xf32>
    %cst_44 = arith.constant 3.200000e+01 : f32
    %71 = vector.broadcast %cst_44 : f32 to vector<8x1xf32>
    %72 = arith.divf %70, %71 : vector<8x1xf32>
    %73 = arith.mulf %68, %68 : vector<8x32xf32>
    %cst_45 = arith.constant dense<0.000000e+00> : vector<8xf32>
    %74 = vector.multi_reduction <add>, %73, %cst_45 [1] : vector<8x32xf32> to vector<8xf32>
    %75 = vector.shape_cast %74 : vector<8xf32> to vector<8x1xf32>
    %cst_46 = arith.constant 3.200000e+01 : f32
    %76 = vector.broadcast %cst_46 : f32 to vector<8x1xf32>
    %77 = arith.divf %75, %76 : vector<8x1xf32>
    %78 = arith.mulf %72, %72 : vector<8x1xf32>
    %79 = arith.subf %77, %78 : vector<8x1xf32>
    %cst_47 = arith.constant 0.000000e+00 : f32
    %80 = vector.broadcast %cst_47 : f32 to vector<8x1xf32>
    %81 = arith.maximumf %79, %80 : vector<8x1xf32>
    %82 = vector.broadcast %72 : vector<8x1xf32> to vector<8x32xf32>
    %83 = arith.subf %68, %82 : vector<8x32xf32>
    %cst_48 = arith.constant 9.99999974E-6 : f32
    %84 = vector.broadcast %cst_48 : f32 to vector<8x1xf32>
    %85 = arith.addf %81, %84 : vector<8x1xf32>
    %86 = math.rsqrt %85 : vector<8x1xf32>
    %87 = vector.broadcast %86 : vector<8x1xf32> to vector<8x32xf32>
    %88 = arith.mulf %83, %87 : vector<8x32xf32>
    %89 = vector.broadcast %61 : vector<1x32xf32> to vector<8x32xf32>
    %90 = arith.mulf %88, %89 : vector<8x32xf32>
    %91 = vector.broadcast %62 : vector<1x32xf32> to vector<8x32xf32>
    %92 = arith.addf %90, %91 : vector<8x32xf32>
    %93 = arith.truncf %92 : vector<8x32xf32> to vector<8x32xbf16>
    %cst_49 = arith.constant dense<0.000000e+00> : vector<8x32xf32>
    %94 = tpu.matmul %93, %63, %cst_49 {dimension_numbers = #tpu.dot_dimension_numbers<[1], [0], [0], [1], [0, 0, 1, 1], [], []>} : vector<8x32xbf16>, vector<32x32xbf16>, vector<8x32xf32> -> vector<8x32xf32>
    %95 = vector.broadcast %65 : vector<1x32xf32> to vector<8x32xf32>
    %96 = arith.addf %94, %95 : vector<8x32xf32>
    %97 = arith.mulf %96, %96 : vector<8x32xf32>
    %98 = arith.mulf %96, %97 : vector<8x32xf32>
    %cst_50 = arith.constant 4.471500e-02 : f32
    %99 = vector.broadcast %cst_50 : f32 to vector<8x32xf32>
    %100 = arith.mulf %99, %98 : vector<8x32xf32>
    %101 = arith.addf %96, %100 : vector<8x32xf32>
    %cst_51 = arith.constant 0.797884583 : f32
    %102 = vector.broadcast %cst_51 : f32 to vector<8x32xf32>
    %103 = arith.mulf %102, %101 : vector<8x32xf32>
    %104 = math.tanh %103 : vector<8x32xf32>
    %cst_52 = arith.constant 1.000000e+00 : f32
    %105 = vector.broadcast %cst_52 : f32 to vector<8x32xf32>
    %106 = arith.addf %105, %104 : vector<8x32xf32>
    %cst_53 = arith.constant 5.000000e-01 : f32
    %107 = vector.broadcast %cst_53 : f32 to vector<8x32xf32>
    %108 = arith.mulf %107, %106 : vector<8x32xf32>
    %109 = arith.mulf %96, %108 : vector<8x32xf32>
    %110 = arith.truncf %109 : vector<8x32xf32> to vector<8x32xbf16>
    %cst_54 = arith.constant dense<0.000000e+00> : vector<8x32xf32>
    %111 = tpu.matmul %110, %64, %cst_54 {dimension_numbers = #tpu.dot_dimension_numbers<[1], [0], [0], [1], [0, 0, 1, 1], [], []>} : vector<8x32xbf16>, vector<32x32xbf16>, vector<8x32xf32> -> vector<8x32xf32>
    %112 = vector.broadcast %66 : vector<1x32xf32> to vector<8x32xf32>
    %113 = arith.addf %111, %112 : vector<8x32xf32>
    %114 = arith.addf %113, %68 : vector<8x32xf32>
    %115 = vector.shape_cast %114 : vector<8x32xf32> to vector<1x8x32xf32>
    %c0_55 = arith.constant 0 : index
    %c0_56 = arith.constant 0 : index
    %c0_57 = arith.constant 0 : index
    %116 = vector.load %arg14[%c0_55, %c0_56, %c0_57] : memref<1x8x32xf32, #tpu.memory_space<vmem>>, vector<1x8x32xf32>
    tpu.vector_store %arg14[%c0_55, %c0_56, %c0_57], %115 {strides = array<i32>} : memref<1x8x32xf32, #tpu.memory_space<vmem>>, vector<1x8x32xf32>,
    return
  }
  func.func @transform_0(%arg0: i32) -> (i32, i32, i32) {
    %c0_i32 = arith.constant 0 : i32
    %c0_i32_0 = arith.constant 0 : i32
    %c0_i32_1 = arith.constant 0 : i32
    return %arg0, %c0_i32, %c0_i32_0 : i32, i32, i32
  }
  func.func @transform_1(%arg0: i32) -> (i32, i32) {
    %c0_i32 = arith.constant 0 : i32
    %c0_i32_0 = arith.constant 0 : i32
    %c0_i32_1 = arith.constant 0 : i32
    return %c0_i32, %c0_i32_0 : i32, i32
  }
  func.func @transform_2(%arg0: i32) -> (i32, i32) {
    %c0_i32 = arith.constant 0 : i32
    %c0_i32_0 = arith.constant 0 : i32
    %c0_i32_1 = arith.constant 0 : i32
    return %c0_i32, %c0_i32_0 : i32, i32
  }
  func.func @transform_3(%arg0: i32) -> (i32, i32) {
    %c0_i32 = arith.constant 0 : i32
    %c0_i32_0 = arith.constant 0 : i32
    %c0_i32_1 = arith.constant 0 : i32
    return %c0_i32, %c0_i32_0 : i32, i32
  }
  func.func @transform_4(%arg0: i32) -> (i32, i32) {
    %c0_i32 = arith.constant 0 : i32
    %c0_i32_0 = arith.constant 0 : i32
    %c0_i32_1 = arith.constant 0 : i32
    return %c0_i32, %c0_i32_0 : i32, i32
  }
  func.func @transform_5(%arg0: i32) -> (i32, i32) {
    %c0_i32 = arith.constant 0 : i32
    %c0_i32_0 = arith.constant 0 : i32
    %c0_i32_1 = arith.constant 0 : i32
    return %c0_i32, %c0_i32_0 : i32, i32
  }
  func.func @transform_6(%arg0: i32) -> (i32, i32) {
    %c0_i32 = arith.constant 0 : i32
    %c0_i32_0 = arith.constant 0 : i32
    %c0_i32_1 = arith.constant 0 : i32
    return %c0_i32, %c0_i32_0 : i32, i32
  }
  func.func @transform_7(%arg0: i32) -> (i32, i32) {
    %c0_i32 = arith.constant 0 : i32
    %c0_i32_0 = arith.constant 0 : i32
    %c0_i32_1 = arith.constant 0 : i32
    return %c0_i32, %c0_i32_0 : i32, i32
  }
  func.func @transform_8(%arg0: i32) -> (i32, i32) {
    %c0_i32 = arith.constant 0 : i32
    %c0_i32_0 = arith.constant 0 : i32
    %c0_i32_1 = arith.constant 0 : i32
    return %c0_i32, %c0_i32_0 : i32, i32
  }
  func.func @transform_9(%arg0: i32) -> (i32, i32) {
    %c0_i32 = arith.constant 0 : i32
    %c0_i32_0 = arith.constant 0 : i32
    %c0_i32_1 = arith.constant 0 : i32
    return %c0_i32, %c0_i32_0 : i32, i32
  }
  func.func @transform_10(%arg0: i32) -> (i32, i32) {
    %c0_i32 = arith.constant 0 : i32
    %c0_i32_0 = arith.constant 0 : i32
    %c0_i32_1 = arith.constant 0 : i32
    return %c0_i32, %c0_i32_0 : i32, i32
  }
  func.func @transform_11(%arg0: i32) -> (i32, i32) {
    %c0_i32 = arith.constant 0 : i32
    %c0_i32_0 = arith.constant 0 : i32
    %c0_i32_1 = arith.constant 0 : i32
    return %c0_i32, %c0_i32_0 : i32, i32
  }
  func.func @transform_12(%arg0: i32) -> (i32, i32) {
    %c0_i32 = arith.constant 0 : i32
    %c0_i32_0 = arith.constant 0 : i32
    %c0_i32_1 = arith.constant 0 : i32
    return %c0_i32, %c0_i32_0 : i32, i32
  }
  func.func @transform_13(%arg0: i32) -> (i32, i32, i32) {
    %c0_i32 = arith.constant 0 : i32
    %c0_i32_0 = arith.constant 0 : i32
    %c0_i32_1 = arith.constant 0 : i32
    return %arg0, %c0_i32, %c0_i32_0 : i32, i32, i32
  }
}

</mosaic_0001>

<llo_original>
// kernel: tpu_custom_call.1
$region0: #{tpu_custom_call.1}
  #allocation0 [shape = 'u32[]', space=smem, size = 0x4, offset = 0x4, fixed_abs, tag = 'smem constant byte address 0x4 - core index']
  #allocation1 [shape = 'u32[144,128]{1,0:T(1,128)}', space=vmem, size = 0x12000, scoped, tag = 'internal scratch']
  %s0 = inlined_call_operand.hbm [shape: f32[8,128], index: 0, kind: input, shape index: {}]
  %s1 = inlined_call_operand.hbm [shape: f32[16,128], index: 1, kind: output, shape index: {}]
  %s2 = sld [smem:[#allocation0]]
  $region41: #{tpu_custom_call.1} parent=0
    _
  %s4 = ssub.s32 1, %s2
  %s5 = scalar_select 0, %s4, %s2
  $region1: #{tpu_custom_call.1} parent=0
    #allocation2 [shape = 'u8[4096]{0}', space=vmem, size = 0x1000, scoped, tag = 'input window, operand 0, single buffered']
    #allocation3 [shape = 's32[2]{0}', space=sflag, size = 0x8, scoped, tag = 'scoped memory for tpu_custom_call.1']
    #allocation4 [shape = 's32[2]{0}', space=sflag, size = 0x8, scoped, tag = 'scoped memory for tpu_custom_call.1']
    #allocation5 [shape = 'u8[8192]{0}', space=vmem, size = 0x2000, scoped, tag = 'output window, operand 0']
    %6 = vsyncpa [#allocation3], 0
    %7 = vsyncpa [#allocation4], 0
    %s8 = scalar_lea.sflag [#allocation4], 1
    %9 = vsyncpa %s8, 0
    loop: start=0, step=1, limit=4
    $region2: #{tpu_custom_call.1} parent=1 // loop_pre_header
      _
    $region3: #{tpu_custom_call.1} parent=1 // loop_header
      %s11 = sphi 0, %s15
      %p12 = scmp.ge.s32.totalorder %s11, 4
      %s19 = sphi 0, %s19
      %s21 = sphi 0, %s19
      %s22 = sphi 0, %s21
      %s36 = sphi 0, %s22
      %s42 = sphi 0, %s44
      %s45 = sphi 0, %s42
      %s46 = sphi 0, %s45
      %s62 = sphi 0, %s46
    $region4: #{tpu_custom_call.1} parent=1 // loop_header_branch
      %14 = sbr.rel (%p12) target = $region8
    $region5: #{tpu_custom_call.1} parent=1 // loop_body
      %s16 = ssub.s32 %s11, 1
      %s17 = ssub.s32 %s11, 2
      %s18 = sadd.s32 %s11, 1
      %s20 = sadd.s32 %s19, 1
      %p23 = scmp.eq.s32.totalorder %s11, 1
      %p24 = scmp.ne.s32.totalorder %s19, %s21
      %p25 = scmp.eq.s32.totalorder %s11, 0
      %p26 = por %p24, %p25
      %p27 = scmp.ne.s32.totalorder %s19, %s21
      %p28 = scmp.eq.s32.totalorder %s16, 1
      %p29 = por %p27, %p28
      %p30 = scmp.ne.s32.totalorder %s21, %s22
      %p31 = scmp.eq.s32.totalorder %s16, 0
      %p32 = por %p30, %p31
      %p33 = scmp.ne.s32.totalorder %s21, %s22
      %p34 = scmp.eq.s32.totalorder %s17, 1
      %p35 = por %p33, %p34
      %p37 = scmp.ne.s32.totalorder %s22, %s36
      %p38 = scmp.eq.s32.totalorder %s17, 0
      %p39 = por %p37, %p38
      %s40 = ssub.s32 %s11, %s18
      %p41 = scmp.eq.s32.totalorder %s40, 0
      %s43 = sadd.s32 %s42, 1
      %s44 = scalar_select %p41, %s42, %s43
      %p47 = pneg %p41
      %p48 = scmp.eq.s32.totalorder %s11, 1
      %p49 = por %p47, %p48
      %p50 = scmp.ne.s32.totalorder %s42, %s45
      %p51 = scmp.eq.s32.totalorder %s11, 0
      %p52 = por %p50, %p51
      %p53 = scmp.ne.s32.totalorder %s42, %s45
      %p54 = scmp.eq.s32.totalorder %s16, 1
      %p55 = por %p53, %p54
      %p56 = scmp.ne.s32.totalorder %s45, %s46
      %p57 = scmp.eq.s32.totalorder %s16, 0
      %p58 = por %p56, %p57
      %p59 = scmp.ne.s32.totalorder %s45, %s46
      %p60 = scmp.eq.s32.totalorder %s17, 1
      %p61 = por %p59, %p60
      %p63 = scmp.ne.s32.totalorder %s46, %s62
      %p64 = scmp.eq.s32.totalorder %s17, 0
      %p65 = por %p63, %p64
      %p66 = scmp.le.s32.totalorder 1, %s11
      %p67 = scmp.lt.s32.totalorder %s11, 3
      %p68 = pnand %p66, %p67
      %p69 = pneg %p68
      // Predicated region
      $region9: #{tpu_custom_call.1} parent=5 // pred_check
        _
      $region10: #{tpu_custom_call.1} parent=5 // pred_check_branch
        %71 = sbr.rel (%p68) target = $region12
      $region11: #{tpu_custom_call.1} parent=5 // pred_region
        %s72 = ssub.s32 %s11, 1
        // Predicated region
        $region13: #{tpu_custom_call.1} parent=11 // pred_check
          %p73 = pneg %p32
        $region14: #{tpu_custom_call.1} parent=11 // pred_check_branch
          %75 = sbr.rel (%p73) target = $region16
        $region15: #{tpu_custom_call.1} parent=11 // pred_region
          %s77 = ssub.s32 128, 128
          %78 = vsyncadd [#allocation3], %s77
          %s80 = sshll.u32 [#allocation2], 4
          %s81 = int_to_ptr.vmem [resolvable:$true] %s80
          %83 = dma.hbm_to_vmem [thread:$0]  %s0, 128, %s81, [#allocation3]
        $region16: #{tpu_custom_call.1} parent=11 // pred_fallthru
          _
      $region12: #{tpu_custom_call.1} parent=5 // pred_fallthru
        _
      %p84 = scmp.lt.s32.totalorder %s11, 2
      // Predicated region
      $region17: #{tpu_custom_call.1} parent=5 // pred_check
        %p85 = pneg %p84
      $region18: #{tpu_custom_call.1} parent=5 // pred_check_branch
        %87 = sbr.rel (%p85) target = $region20
      $region19: #{tpu_custom_call.1} parent=5 // pred_region
        _
      $region20: #{tpu_custom_call.1} parent=5 // pred_fallthru
        _
      %p88 = scmp.le.s32.totalorder 1, %s11
      %p89 = scmp.lt.s32.totalorder %s11, 3
      %p90 = pnand %p88, %p89
      %p91 = pneg %p90
      // Predicated region
      $region21: #{tpu_custom_call.1} parent=5 // pred_check
        _
      $region22: #{tpu_custom_call.1} parent=5 // pred_check_branch
        %93 = sbr.rel (%p90) target = $region24
      $region23: #{tpu_custom_call.1} parent=5 // pred_region
        %s94 = ssub.s32 %s11, 1
        // Predicated region
        $region25: #{tpu_custom_call.1} parent=23 // pred_check
          %p95 = pneg %p32
        $region26: #{tpu_custom_call.1} parent=23 // pred_check_branch
          %97 = sbr.rel (%p95) target = $region28
        $region27: #{tpu_custom_call.1} parent=23 // pred_region
          %98 = dma.done [#allocation3], 128
        $region28: #{tpu_custom_call.1} parent=23 // pred_fallthru
          _
        %p99 = pneg %p32
        %p100 = pneg %p29
        %p101 = pneg %p58
        %p102 = pneg %p55
        %s103 = sand.u32 %s45, 1
        %s104 = scalar_lea.sflag [#allocation4], %s103
        %s105 = sand.u32 %s45, 1
        %s106 = smul.addr %s105, 8
        %s107 = scalar_lea.vmem [#allocation5], %s106
        %v108 = vld [vmem:[#allocation2] sm:$0xff]
        %v109 = vmul.f32 %v108, 2.0
        %110 = vst [vmem:[%s107] sm:$0xff] %v109
        %s111 = sand.u32 %s45, 1
        %s112 = scalar_lea.sflag [#allocation4], %s111
        %s113 = sand.u32 %s45, 1
        %s114 = smul.addr %s113, 8
        %s115 = scalar_lea.vmem [#allocation5], %s114
        // Predicated region
        $region29: #{tpu_custom_call.1} parent=23 // pred_check
          %p116 = pneg %p55
        $region30: #{tpu_custom_call.1} parent=23 // pred_check_branch
          %118 = sbr.rel (%p116) target = $region32
        $region31: #{tpu_custom_call.1} parent=23 // pred_region
          %s120 = ssub.s32 128, 128
          %121 = vsyncadd %s112, %s120
          %s122 = smul.addr %s16, 128
          %s123 = scalar_lea.hbm %s1, %s122
          %s125 = sshll.u32 %s115, 4
          %s126 = int_to_ptr.vmem [resolvable:$true] %s125
          %128 = dma.vmem_to_hbm [thread:$0]  %s126, 128, %s123, %s112
        $region32: #{tpu_custom_call.1} parent=23 // pred_fallthru
          _
      $region24: #{tpu_custom_call.1} parent=5 // pred_fallthru
        _
      %p129 = scmp.le.s32.totalorder 2, %s11
      // Predicated region
      $region33: #{tpu_custom_call.1} parent=5 // pred_check
        %p130 = pneg %p129
      $region34: #{tpu_custom_call.1} parent=5 // pred_check_branch
        %132 = sbr.rel (%p130) target = $region36
      $region35: #{tpu_custom_call.1} parent=5 // pred_region
        %s133 = ssub.s32 %s11, 2
        // Predicated region
        $region37: #{tpu_custom_call.1} parent=35 // pred_check
          %p134 = pneg %p61
        $region38: #{tpu_custom_call.1} parent=35 // pred_check_branch
          %136 = sbr.rel (%p134) target = $region40
        $region39: #{tpu_custom_call.1} parent=35 // pred_region
          %s137 = sand.u32 %s46, 1
          %s138 = scalar_lea.sflag [#allocation4], %s137
          %s139 = sand.u32 %s46, 1
          %s140 = smul.addr %s139, 8
          %s141 = scalar_lea.vmem [#allocation5], %s140
          %142 = dma.done %s138, 128
        $region40: #{tpu_custom_call.1} parent=35 // pred_fallthru
          _
      $region36: #{tpu_custom_call.1} parent=5 // pred_fallthru
        _
    $region6: #{tpu_custom_call.1} parent=1 // loop_footer
      %s15 = sadd.s32 1, %s11
    $region7: #{tpu_custom_call.1} parent=1 // loop_footer_branch
      %10 = sbr.rel target = $region3
    $region8: #{tpu_custom_call.1} parent=1 // loop_exit
      _
    %143 = vsyncpa [#allocation3], 1
    %s144 = scalar_lea.sflag [#allocation3], 1
    %145 = vsyncpa %s144, 1
    %146 = vsyncpa [#allocation4], 1
    %s147 = scalar_lea.sflag [#allocation4], 1
    %148 = vsyncpa %s147, 1

// kernel: tpu_custom_call.1
$region0: #{tpu_custom_call.1}
  #allocation0 [shape = 'u32[]', space=smem, size = 0x4, offset = 0x4, fixed_abs, tag = 'smem constant byte address 0x4 - core index']
  #allocation1 [shape = 'u32[144,128]{1,0:T(1,128)}', space=vmem, size = 0x12000, scoped, tag = 'internal scratch']
  #allocation2 [shape = 'f32[1,8,32]{2,1,0:T(8,128)}', space=vmem, size = 0x1000, scoped, tag = 'scratch operand']
  %s0 = inlined_call_operand.vmem [shape: f32[2,8,32], index: 0, kind: input, shape index: {}]
  %s1 = inlined_call_operand.vmem [shape: f32[8,1], index: 1, kind: input, shape index: {}]
  %s2 = inlined_call_operand.vmem [shape: f32[8,1], index: 2, kind: input, shape index: {}]
  %s3 = inlined_call_operand.hbm [shape: bf16[8,8], index: 3, kind: input, shape index: {}]
  %s4 = inlined_call_operand.vmem [shape: f32[8,1], index: 4, kind: input, shape index: {}]
  %s5 = inlined_call_operand.vmem [shape: bf16[8,8], index: 5, kind: input, shape index: {}]
  %s6 = inlined_call_operand.vmem [shape: f32[8,1], index: 6, kind: input, shape index: {}]
  %s7 = inlined_call_operand.vmem [shape: f32[1,32], index: 7, kind: input, shape index: {}]
  %s8 = inlined_call_operand.vmem [shape: f32[1,32], index: 8, kind: input, shape index: {}]
  %s9 = inlined_call_operand.vmem [shape: bf16[32,32], index: 9, kind: input, shape index: {}]
  %s10 = inlined_call_operand.vmem [shape: f32[1,32], index: 10, kind: input, shape index: {}]
  %s11 = inlined_call_operand.vmem [shape: bf16[32,32], index: 11, kind: input, shape index: {}]
  %s12 = inlined_call_operand.vmem [shape: f32[1,32], index: 12, kind: input, shape index: {}]
  %s13 = inlined_call_operand.hbm [shape: f32[2,8,32], index: 13, kind: output, shape index: {}]
  %s14 = sld [smem:[#allocation0]]
  $region89: #{tpu_custom_call.1} parent=0
    _
  %s16 = ssub.s32 1, %s14
  %s17 = scalar_select 0, %s16, %s14
  $region1: #{tpu_custom_call.1} parent=0
    #allocation3 [shape = 'u8[2048]{0}', space=vmem, size = 0x800, scoped, tag = 'input window, operand 3, single buffered']
    #allocation4 [shape = 's32[2]{0}', space=sflag, size = 0x8, scoped, tag = 'scoped memory for tpu_custom_call.1']
    #allocation5 [shape = 's32[2]{0}', space=sflag, size = 0x8, scoped, tag = 'scoped memory for tpu_custom_call.1']
    #allocation6 [shape = 'u8[8192]{0}', space=vmem, size = 0x2000, scoped, tag = 'output window, operand 0']
    %18 = vsyncpa [#allocation4], 0
    %19 = vsyncpa [#allocation5], 0
    %s20 = scalar_lea.sflag [#allocation5], 1
    %21 = vsyncpa %s20, 0
    loop: start=0, step=1, limit=4
    $region2: #{tpu_custom_call.1} parent=1 // loop_pre_header
      _
    $region3: #{tpu_custom_call.1} parent=1 // loop_header
      %s23 = sphi 0, %s27
      %p24 = scmp.ge.s32.totalorder %s23, 4
      %s33 = sphi 0, %s35
      %s36 = sphi 0, %s33
      %s37 = sphi 0, %s36
      %s53 = sphi 0, %s37
      %s57 = sphi 0, %s57
      %s59 = sphi 0, %s57
      %s60 = sphi 0, %s59
      %s74 = sphi 0, %s60
      %s78 = sphi 0, %s78
      %s80 = sphi 0, %s78
      %s81 = sphi 0, %s80
      %s95 = sphi 0, %s81
      %s99 = sphi 0, %s99
      %s101 = sphi 0, %s99
      %s102 = sphi 0, %s101
      %s116 = sphi 0, %s102
      %s120 = sphi 0, %s120
      %s122 = sphi 0, %s120
      %s123 = sphi 0, %s122
      %s137 = sphi 0, %s123
      %s141 = sphi 0, %s141
      %s143 = sphi 0, %s141
      %s144 = sphi 0, %s143
      %s158 = sphi 0, %s144
      %s162 = sphi 0, %s162
      %s164 = sphi 0, %s162
      %s165 = sphi 0, %s164
      %s179 = sphi 0, %s165
      %s183 = sphi 0, %s183
      %s185 = sphi 0, %s183
      %s186 = sphi 0, %s185
      %s200 = sphi 0, %s186
      %s204 = sphi 0, %s204
      %s206 = sphi 0, %s204
      %s207 = sphi 0, %s206
      %s221 = sphi 0, %s207
      %s225 = sphi 0, %s225
      %s227 = sphi 0, %s225
      %s228 = sphi 0, %s227
      %s242 = sphi 0, %s228
      %s246 = sphi 0, %s246
      %s248 = sphi 0, %s246
      %s249 = sphi 0, %s248
      %s263 = sphi 0, %s249
      %s267 = sphi 0, %s267
      %s269 = sphi 0, %s267
      %s270 = sphi 0, %s269
      %s284 = sphi 0, %s270
      %s288 = sphi 0, %s288
      %s290 = sphi 0, %s288
      %s291 = sphi 0, %s290
      %s305 = sphi 0, %s291
      %s311 = sphi 0, %s313
      %s314 = sphi 0, %s311
      %s315 = sphi 0, %s314
      %s331 = sphi 0, %s315
    $region4: #{tpu_custom_call.1} parent=1 // loop_header_branch
      %26 = sbr.rel (%p24) target = $region8
    $region5: #{tpu_custom_call.1} parent=1 // loop_body
      %s28 = ssub.s32 %s23, 1
      %s29 = ssub.s32 %s23, 2
      %s30 = sadd.s32 %s23, 1
      %s31 = ssub.s32 %s23, %s30
      %p32 = scmp.eq.s32.totalorder %s31, 0
      %s34 = sadd.s32 %s33, 1
      %s35 = scalar_select %p32, %s33, %s34
      %p38 = pneg %p32
      %p39 = scmp.eq.s32.totalorder %s23, 1
      %p40 = por %p38, %p39
      %p41 = scmp.ne.s32.totalorder %s33, %s36
      %p42 = scmp.eq.s32.totalorder %s23, 0
      %p43 = por %p41, %p42
      %p44 = scmp.ne.s32.totalorder %s33, %s36
      %p45 = scmp.eq.s32.totalorder %s28, 1
      %p46 = por %p44, %p45
      %p47 = scmp.ne.s32.totalorder %s36, %s37
      %p48 = scmp.eq.s32.totalorder %s28, 0
      %p49 = por %p47, %p48
      %p50 = scmp.ne.s32.totalorder %s36, %s37
      %p51 = scmp.eq.s32.totalorder %s29, 1
      %p52 = por %p50, %p51
      %p54 = scmp.ne.s32.totalorder %s37, %s53
      %p55 = scmp.eq.s32.totalorder %s29, 0
      %p56 = por %p54, %p55
      %s58 = sadd.s32 %s57, 1
      %p61 = scmp.eq.s32.totalorder %s23, 1
      %p62 = scmp.ne.s32.totalorder %s57, %s59
      %p63 = scmp.eq.s32.totalorder %s23, 0
      %p64 = por %p62, %p63
      %p65 = scmp.ne.s32.totalorder %s57, %s59
      %p66 = scmp.eq.s32.totalorder %s28, 1
      %p67 = por %p65, %p66
      %p68 = scmp.ne.s32.totalorder %s59, %s60
      %p69 = scmp.eq.s32.totalorder %s28, 0
      %p70 = por %p68, %p69
      %p71 = scmp.ne.s32.totalorder %s59, %s60
      %p72 = scmp.eq.s32.totalorder %s29, 1
      %p73 = por %p71, %p72
      %p75 = scmp.ne.s32.totalorder %s60, %s74
      %p76 = scmp.eq.s32.totalorder %s29, 0
      %p77 = por %p75, %p76
      %s79 = sadd.s32 %s78, 1
      %p82 = scmp.eq.s32.totalorder %s23, 1
      %p83 = scmp.ne.s32.totalorder %s78, %s80
      %p84 = scmp.eq.s32.totalorder %s23, 0
      %p85 = por %p83, %p84
      %p86 = scmp.ne.s32.totalorder %s78, %s80
      %p87 = scmp.eq.s32.totalorder %s28, 1
      %p88 = por %p86, %p87
      %p89 = scmp.ne.s32.totalorder %s80, %s81
      %p90 = scmp.eq.s32.totalorder %s28, 0
      %p91 = por %p89, %p90
      %p92 = scmp.ne.s32.totalorder %s80, %s81
      %p93 = scmp.eq.s32.totalorder %s29, 1
      %p94 = por %p92, %p93
      %p96 = scmp.ne.s32.totalorder %s81, %s95
      %p97 = scmp.eq.s32.totalorder %s29, 0
      %p98 = por %p96, %p97
      %s100 = sadd.s32 %s99, 1
      %p103 = scmp.eq.s32.totalorder %s23, 1
      %p104 = scmp.ne.s32.totalorder %s99, %s101
      %p105 = scmp.eq.s32.totalorder %s23, 0
      %p106 = por %p104, %p105
      %p107 = scmp.ne.s32.totalorder %s99, %s101
      %p108 = scmp.eq.s32.totalorder %s28, 1
      %p109 = por %p107, %p108
      %p110 = scmp.ne.s32.totalorder %s101, %s102
      %p111 = scmp.eq.s32.totalorder %s28, 0
      %p112 = por %p110, %p111
      %p113 = scmp.ne.s32.totalorder %s101, %s102
      %p114 = scmp.eq.s32.totalorder %s29, 1
      %p115 = por %p113, %p114
      %p117 = scmp.ne.s32.totalorder %s102, %s116
      %p118 = scmp.eq.s32.totalorder %s29, 0
      %p119 = por %p117, %p118
      %s121 = sadd.s32 %s120, 1
      %p124 = scmp.eq.s32.totalorder %s23, 1
      %p125 = scmp.ne.s32.totalorder %s120, %s122
      %p126 = scmp.eq.s32.totalorder %s23, 0
      %p127 = por %p125, %p126
      %p128 = scmp.ne.s32.totalorder %s120, %s122
      %p129 = scmp.eq.s32.totalorder %s28, 1
      %p130 = por %p128, %p129
      %p131 = scmp.ne.s32.totalorder %s122, %s123
      %p132 = scmp.eq.s32.totalorder %s28, 0
      %p133 = por %p131, %p132
      %p134 = scmp.ne.s32.totalorder %s122, %s123
      %p135 = scmp.eq.s32.totalorder %s29, 1
      %p136 = por %p134, %p135
      %p138 = scmp.ne.s32.totalorder %s123, %s137
      %p139 = scmp.eq.s32.totalorder %s29, 0
      %p140 = por %p138, %p139
      %s142 = sadd.s32 %s141, 1
      %p145 = scmp.eq.s32.totalorder %s23, 1
      %p146 = scmp.ne.s32.totalorder %s141, %s143
      %p147 = scmp.eq.s32.totalorder %s23, 0
      %p148 = por %p146, %p147
      %p149 = scmp.ne.s32.totalorder %s141, %s143
      %p150 = scmp.eq.s32.totalorder %s28, 1
      %p151 = por %p149, %p150
      %p152 = scmp.ne.s32.totalorder %s143, %s144
      %p153 = scmp.eq.s32.totalorder %s28, 0
      %p154 = por %p152, %p153
      %p155 = scmp.ne.s32.totalorder %s143, %s144
      %p156 = scmp.eq.s32.totalorder %s29, 1
      %p157 = por %p155, %p156
      %p159 = scmp.ne.s32.totalorder %s144, %s158
      %p160 = scmp.eq.s32.totalorder %s29, 0
      %p161 = por %p159, %p160
      %s163 = sadd.s32 %s162, 1
      %p166 = scmp.eq.s32.totalorder %s23, 1
      %p167 = scmp.ne.s32.totalorder %s162, %s164
      %p168 = scmp.eq.s32.totalorder %s23, 0
      %p169 = por %p167, %p168
      %p170 = scmp.ne.s32.totalorder %s162, %s164
      %p171 = scmp.eq.s32.totalorder %s28, 1
      %p172 = por %p170, %p171
      %p173 = scmp.ne.s32.totalorder %s164, %s165
      %p174 = scmp.eq.s32.totalorder %s28, 0
      %p175 = por %p173, %p174
      %p176 = scmp.ne.s32.totalorder %s164, %s165
      %p177 = scmp.eq.s32.totalorder %s29, 1
      %p178 = por %p176, %p177
      %p180 = scmp.ne.s32.totalorder %s165, %s179
      %p181 = scmp.eq.s32.totalorder %s29, 0
      %p182 = por %p180, %p181
      %s184 = sadd.s32 %s183, 1
      %p187 = scmp.eq.s32.totalorder %s23, 1
      %p188 = scmp.ne.s32.totalorder %s183, %s185
      %p189 = scmp.eq.s32.totalorder %s23, 0
      %p190 = por %p188, %p189
      %p191 = scmp.ne.s32.totalorder %s183, %s185
      %p192 = scmp.eq.s32.totalorder %s28, 1
      %p193 = por %p191, %p192
      %p194 = scmp.ne.s32.totalorder %s185, %s186
      %p195 = scmp.eq.s32.totalorder %s28, 0
      %p196 = por %p194, %p195
      %p197 = scmp.ne.s32.totalorder %s185, %s186
      %p198 = scmp.eq.s32.totalorder %s29, 1
      %p199 = por %p197, %p198
      %p201 = scmp.ne.s32.totalorder %s186, %s200
      %p202 = scmp.eq.s32.totalorder %s29, 0
      %p203 = por %p201, %p202
      %s205 = sadd.s32 %s204, 1
      %p208 = scmp.eq.s32.totalorder %s23, 1
      %p209 = scmp.ne.s32.totalorder %s204, %s206
      %p210 = scmp.eq.s32.totalorder %s23, 0
      %p211 = por %p209, %p210
      %p212 = scmp.ne.s32.totalorder %s204, %s206
      %p213 = scmp.eq.s32.totalorder %s28, 1
      %p214 = por %p212, %p213
      %p215 = scmp.ne.s32.totalorder %s206, %s207
      %p216 = scmp.eq.s32.totalorder %s28, 0
      %p217 = por %p215, %p216
      %p218 = scmp.ne.s32.totalorder %s206, %s207
      %p219 = scmp.eq.s32.totalorder %s29, 1
      %p220 = por %p218, %p219
      %p222 = scmp.ne.s32.totalorder %s207, %s221
      %p223 = scmp.eq.s32.totalorder %s29, 0
      %p224 = por %p222, %p223
      %s226 = sadd.s32 %s225, 1
      %p229 = scmp.eq.s32.totalorder %s23, 1
      %p230 = scmp.ne.s32.totalorder %s225, %s227
      %p231 = scmp.eq.s32.totalorder %s23, 0
      %p232 = por %p230, %p231
      %p233 = scmp.ne.s32.totalorder %s225, %s227
      %p234 = scmp.eq.s32.totalorder %s28, 1
      %p235 = por %p233, %p234
      %p236 = scmp.ne.s32.totalorder %s227, %s228
      %p237 = scmp.eq.s32.totalorder %s28, 0
      %p238 = por %p236, %p237
      %p239 = scmp.ne.s32.totalorder %s227, %s228
      %p240 = scmp.eq.s32.totalorder %s29, 1
      %p241 = por %p239, %p240
      %p243 = scmp.ne.s32.totalorder %s228, %s242
      %p244 = scmp.eq.s32.totalorder %s29, 0
      %p245 = por %p243, %p244
      %s247 = sadd.s32 %s246, 1
      %p250 = scmp.eq.s32.totalorder %s23, 1
      %p251 = scmp.ne.s32.totalorder %s246, %s248
      %p252 = scmp.eq.s32.totalorder %s23, 0
      %p253 = por %p251, %p252
      %p254 = scmp.ne.s32.totalorder %s246, %s248
      %p255 = scmp.eq.s32.totalorder %s28, 1
      %p256 = por %p254, %p255
      %p257 = scmp.ne.s32.totalorder %s248, %s249
      %p258 = scmp.eq.s32.totalorder %s28, 0
      %p259 = por %p257, %p258
      %p260 = scmp.ne.s32.totalorder %s248, %s249
      %p261 = scmp.eq.s32.totalorder %s29, 1
      %p262 = por %p260, %p261
      %p264 = scmp.ne.s32.totalorder %s249, %s263
      %p265 = scmp.eq.s32.totalorder %s29, 0
      %p266 = por %p264, %p265
      %s268 = sadd.s32 %s267, 1
      %p271 = scmp.eq.s32.totalorder %s23, 1
      %p272 = scmp.ne.s32.totalorder %s267, %s269
      %p273 = scmp.eq.s32.totalorder %s23, 0
      %p274 = por %p272, %p273
      %p275 = scmp.ne.s32.totalorder %s267, %s269
      %p276 = scmp.eq.s32.totalorder %s28, 1
      %p277 = por %p275, %p276
      %p278 = scmp.ne.s32.totalorder %s269, %s270
      %p279 = scmp.eq.s32.totalorder %s28, 0
      %p280 = por %p278, %p279
      %p281 = scmp.ne.s32.totalorder %s269, %s270
      %p282 = scmp.eq.s32.totalorder %s29, 1
      %p283 = por %p281, %p282
      %p285 = scmp.ne.s32.totalorder %s270, %s284
      %p286 = scmp.eq.s32.totalorder %s29, 0
      %p287 = por %p285, %p286
      %s289 = sadd.s32 %s288, 1
      %p292 = scmp.eq.s32.totalorder %s23, 1
      %p293 = scmp.ne.s32.totalorder %s288, %s290
      %p294 = scmp.eq.s32.totalorder %s23, 0
      %p295 = por %p293, %p294
      %p296 = scmp.ne.s32.totalorder %s288, %s290
      %p297 = scmp.eq.s32.totalorder %s28, 1
      %p298 = por %p296, %p297
      %p299 = scmp.ne.s32.totalorder %s290, %s291
      %p300 = scmp.eq.s32.totalorder %s28, 0
      %p301 = por %p299, %p300
      %p302 = scmp.ne.s32.totalorder %s290, %s291
      %p303 = scmp.eq.s32.totalorder %s29, 1
      %p304 = por %p302, %p303
      %p306 = scmp.ne.s32.totalorder %s291, %s305
      %p307 = scmp.eq.s32.totalorder %s29, 0
      %p308 = por %p306, %p307
      %s309 = ssub.s32 %s23, %s30
      %p310 = scmp.eq.s32.totalorder %s309, 0
      %s312 = sadd.s32 %s311, 1
      %s313 = scalar_select %p310, %s311, %s312
      %p316 = pneg %p310
      %p317 = scmp.eq.s32.totalorder %s23, 1
      %p318 = por %p316, %p317
      %p319 = scmp.ne.s32.totalorder %s311, %s314
      %p320 = scmp.eq.s32.totalorder %s23, 0
      %p321 = por %p319, %p320
      %p322 = scmp.ne.s32.totalorder %s311, %s314
      %p323 = scmp.eq.s32.totalorder %s28, 1
      %p324 = por %p322, %p323
      %p325 = scmp.ne.s32.totalorder %s314, %s315
      %p326 = scmp.eq.s32.totalorder %s28, 0
      %p327 = por %p325, %p326
      %p328 = scmp.ne.s32.totalorder %s314, %s315
      %p329 = scmp.eq.s32.totalorder %s29, 1
      %p330 = por %p328, %p329
      %p332 = scmp.ne.s32.totalorder %s315, %s331
      %p333 = scmp.eq.s32.totalorder %s29, 0
      %p334 = por %p332, %p333
      %p335 = scmp.le.s32.totalorder 1, %s23
      %p336 = scmp.lt.s32.totalorder %s23, 3
      %p337 = pnand %p335, %p336
      %p338 = pneg %p337
      // Predicated region
      $region9: #{tpu_custom_call.1} parent=5 // pred_check
        _
      $region10: #{tpu_custom_call.1} parent=5 // pred_check_branch
        %340 = sbr.rel (%p337) target = $region12
      $region11: #{tpu_custom_call.1} parent=5 // pred_region
        %s341 = ssub.s32 %s23, 1
        // Predicated region
        $region13: #{tpu_custom_call.1} parent=11 // pred_check
          %p342 = pneg %p70
        $region14: #{tpu_custom_call.1} parent=11 // pred_check_branch
          %344 = sbr.rel (%p342) target = $region16
        $region15: #{tpu_custom_call.1} parent=11 // pred_region
          _
        $region16: #{tpu_custom_call.1} parent=11 // pred_fallthru
          _
        // Predicated region
        $region17: #{tpu_custom_call.1} parent=11 // pred_check
          %p345 = pneg %p91
        $region18: #{tpu_custom_call.1} parent=11 // pred_check_branch
          %347 = sbr.rel (%p345) target = $region20
        $region19: #{tpu_custom_call.1} parent=11 // pred_region
          _
        $region20: #{tpu_custom_call.1} parent=11 // pred_fallthru
          _
        // Predicated region
        $region21: #{tpu_custom_call.1} parent=11 // pred_check
          %p348 = pneg %p112
        $region22: #{tpu_custom_call.1} parent=11 // pred_check_branch
          %350 = sbr.rel (%p348) target = $region24
        $region23: #{tpu_custom_call.1} parent=11 // pred_region
          %s352 = ssub.s32 64, 64
          %353 = vsyncadd [#allocation4], %s352
          %s355 = sshll.u32 [#allocation3], 4
          %s356 = int_to_ptr.vmem [resolvable:$true] %s355
          %358 = dma.hbm_to_vmem [thread:$0]  %s3, 64, %s356, [#allocation4]
        $region24: #{tpu_custom_call.1} parent=11 // pred_fallthru
          _
        // Predicated region
        $region25: #{tpu_custom_call.1} parent=11 // pred_check
          %p359 = pneg %p133
        $region26: #{tpu_custom_call.1} parent=11 // pred_check_branch
          %361 = sbr.rel (%p359) target = $region28
        $region27: #{tpu_custom_call.1} parent=11 // pred_region
          _
        $region28: #{tpu_custom_call.1} parent=11 // pred_fallthru
          _
        // Predicated region
        $region29: #{tpu_custom_call.1} parent=11 // pred_check
          %p362 = pneg %p154
        $region30: #{tpu_custom_call.1} parent=11 // pred_check_branch
          %364 = sbr.rel (%p362) target = $region32
        $region31: #{tpu_custom_call.1} parent=11 // pred_region
          _
        $region32: #{tpu_custom_call.1} parent=11 // pred_fallthru
          _
        // Predicated region
        $region33: #{tpu_custom_call.1} parent=11 // pred_check
          %p365 = pneg %p175
        $region34: #{tpu_custom_call.1} parent=11 // pred_check_branch
          %367 = sbr.rel (%p365) target = $region36
        $region35: #{tpu_custom_call.1} parent=11 // pred_region
          _
        $region36: #{tpu_custom_call.1} parent=11 // pred_fallthru
          _
        // Predicated region
        $region37: #{tpu_custom_call.1} parent=11 // pred_check
          %p368 = pneg %p196
        $region38: #{tpu_custom_call.1} parent=11 // pred_check_branch
          %370 = sbr.rel (%p368) target = $region40
        $region39: #{tpu_custom_call.1} parent=11 // pred_region
          _
        $region40: #{tpu_custom_call.1} parent=11 // pred_fallthru
          _
        // Predicated region
        $region41: #{tpu_custom_call.1} parent=11 // pred_check
          %p371 = pneg %p217
        $region42: #{tpu_custom_call.1} parent=11 // pred_check_branch
          %373 = sbr.rel (%p371) target = $region44
        $region43: #{tpu_custom_call.1} parent=11 // pred_region
          _
        $region44: #{tpu_custom_call.1} parent=11 // pred_fallthru
          _
        // Predicated region
        $region45: #{tpu_custom_call.1} parent=11 // pred_check
          %p374 = pneg %p238
        $region46: #{tpu_custom_call.1} parent=11 // pred_check_branch
          %376 = sbr.rel (%p374) target = $region48
        $region47: #{tpu_custom_call.1} parent=11 // pred_region
          _
        $region48: #{tpu_custom_call.1} parent=11 // pred_fallthru
          _
        // Predicated region
        $region49: #{tpu_custom_call.1} parent=11 // pred_check
          %p377 = pneg %p259
        $region50: #{tpu_custom_call.1} parent=11 // pred_check_branch
          %379 = sbr.rel (%p377) target = $region52
        $region51: #{tpu_custom_call.1} parent=11 // pred_region
          _
        $region52: #{tpu_custom_call.1} parent=11 // pred_fallthru
          _
        // Predicated region
        $region53: #{tpu_custom_call.1} parent=11 // pred_check
          %p380 = pneg %p280
        $region54: #{tpu_custom_call.1} parent=11 // pred_check_branch
          %382 = sbr.rel (%p380) target = $region56
        $region55: #{tpu_custom_call.1} parent=11 // pred_region
          _
        $region56: #{tpu_custom_call.1} parent=11 // pred_fallthru
          _
        // Predicated region
        $region57: #{tpu_custom_call.1} parent=11 // pred_check
          %p383 = pneg %p301
        $region58: #{tpu_custom_call.1} parent=11 // pred_check_branch
          %385 = sbr.rel (%p383) target = $region60
        $region59: #{tpu_custom_call.1} parent=11 // pred_region
          _
        $region60: #{tpu_custom_call.1} parent=11 // pred_fallthru
          _
      $region12: #{tpu_custom_call.1} parent=5 // pred_fallthru
        _
      %p386 = scmp.lt.s32.totalorder %s23, 2
      // Predicated region
      $region61: #{tpu_custom_call.1} parent=5 // pred_check
        %p387 = pneg %p386
      $region62: #{tpu_custom_call.1} parent=5 // pred_check_branch
        %389 = sbr.rel (%p387) target = $region64
      $region63: #{tpu_custom_call.1} parent=5 // pred_region
        // Predicated region
        $region65: #{tpu_custom_call.1} parent=63 // pred_check
          %p390 = pneg %p43
        $region66: #{tpu_custom_call.1} parent=63 // pred_check_branch
          %392 = sbr.rel (%p390) target = $region68
        $region67: #{tpu_custom_call.1} parent=63 // pred_region
          %p393 = scmp.lt.s32.totalorder %s23, 1
          %s394 = scalar_select %p393, %s23, 1
          %s395 = smul.addr %s394, 8
          %s396 = scalar_lea.vmem %s0, %s395
        $region68: #{tpu_custom_call.1} parent=63 // pred_fallthru
          _
      $region64: #{tpu_custom_call.1} parent=5 // pred_fallthru
        _
      %p397 = scmp.le.s32.totalorder 1, %s23
      %p398 = scmp.lt.s32.totalorder %s23, 3
      %p399 = pnand %p397, %p398
      %p400 = pneg %p399
      // Predicated region
      $region69: #{tpu_custom_call.1} parent=5 // pred_check
        _
      $region70: #{tpu_custom_call.1} parent=5 // pred_check_branch
        %402 = sbr.rel (%p399) target = $region72
      $region71: #{tpu_custom_call.1} parent=5 // pred_region
        %s403 = ssub.s32 %s23, 1
        // Predicated region
        $region73: #{tpu_custom_call.1} parent=71 // pred_check
          %p404 = pneg %p112
        $region74: #{tpu_custom_call.1} parent=71 // pred_check_branch
          %406 = sbr.rel (%p404) target = $region76
        $region75: #{tpu_custom_call.1} parent=71 // pred_region
          %407 = dma.done [#allocation4], 64
        $region76: #{tpu_custom_call.1} parent=71 // pred_fallthru
          _
        %p408 = scmp.lt.s32.totalorder %s28, 1
        %s409 = scalar_select %p408, %s28, 1
        %s410 = smul.addr %s409, 8
        %s411 = scalar_lea.vmem %s0, %s410
        %p412 = pneg %p49
        %p413 = pneg %p46
        %p414 = pneg %p70
        %p415 = pneg %p67
        %p416 = pneg %p91
        %p417 = pneg %p88
        %p418 = pneg %p112
        %p419 = pneg %p109
        %p420 = pneg %p133
        %p421 = pneg %p130
        %p422 = pneg %p154
        %p423 = pneg %p151
        %p424 = pneg %p175
        %p425 = pneg %p172
        %p426 = pneg %p196
        %p427 = pneg %p193
        %p428 = pneg %p217
        %p429 = pneg %p214
        %p430 = pneg %p238
        %p431 = pneg %p235
        %p432 = pneg %p259
        %p433 = pneg %p256
        %p434 = pneg %p280
        %p435 = pneg %p277
        %p436 = pneg %p301
        %p437 = pneg %p298
        %p438 = pneg %p327
        %p439 = pneg %p324
        %s440 = sand.u32 %s314, 1
        %s441 = scalar_lea.sflag [#allocation5], %s440
        %s442 = sand.u32 %s314, 1
        %s443 = smul.addr %s442, 8
        %s444 = scalar_lea.vmem [#allocation6], %s443
        %p445 = scmp.lt.s32.totalorder %s28, 1
        %s446 = scalar_select %p445, %s28, 1
        %s447 = smul.addr %s446, 8
        %s448 = scalar_lea.vmem %s0, %s447
        %v450 = vld [vmem:[#allocation3] sm:$0xf]
        %v451 = vld [vmem:[%s5] sm:$0xf]
        %v452 = vld [vmem:[%s1] sm:$0xff]
        %454 = vset.pattern.permute.xlu0 0
        %455 = vperm.xlu0 %454, %v452
        %v456 = vpop.permute.xlu0 %455
        %v458 = vld [vmem:[%s2] sm:$0xff]
        %460 = vset.pattern.permute.xlu0 0
        %461 = vperm.xlu0 %460, %v458
        %v462 = vpop.permute.xlu0 %461
        %v464 = vld [vmem:[%s4] sm:$0xff]
        %466 = vset.pattern.permute.xlu0 0
        %467 = vperm.xlu0 %466, %v464
        %v468 = vpop.permute.xlu0 %467
        %v470 = vld [vmem:[%s6] sm:$0xff]
        %472 = vset.pattern.permute.xlu0 0
        %473 = vperm.xlu0 %472, %v470
        %v474 = vpop.permute.xlu0 %473
        %v476 = vld [vmem:[%s448] sm:$0xff]
        %vm477 = vcmask 261120
        %v478 = vsel %vm477, %v476, 0.0
        %v479 = vrot.slane %v478, 4
        %v480 = vadd.f32 %v478, %v479
        %v481 = vrot.slane %v480, 2
        %v482 = vadd.f32 %v480, %v481
        %v483 = vrot.slane %v482, 1
        %v484 = vadd.f32 %v482, %v483
        %v485 = vrcp.pop 8.0
        %v486 = vmul.f32 %v484, %v485
        %v487 = vmul.f32 %v476, %v476
        %v488 = vsel %vm477, %v487, 0.0
        %v489 = vrot.slane %v488, 4
        %v490 = vadd.f32 %v488, %v489
        %v491 = vrot.slane %v490, 2
        %v492 = vadd.f32 %v490, %v491
        %v493 = vrot.slane %v492, 1
        %v494 = vadd.f32 %v492, %v493
        %v495 = vmul.f32 %v494, %v485
        %v496 = vmul.f32 %v486, %v486
        %v497 = vsub.f32 %v495, %v496
        %v498 = vmax.f32 %v497, 0.0
        %v499 = vsub.f32 %v476, %v486
        %v500 = vadd.f32 %v498, 1e-05
        %v501 = vrsqrt.pop %v500
        %v502 = vmul.f32 %v499, %v501
        %v503 = vmul.f32 %v502, %v456
        %v504 = vadd.f32 %v503, %v462
        %v505 = vpack.c.bf16 %v504, %v504
        %vm506 = vcmask 64512
        %v508 = vsel %vm506, %v450, 0
        %vm510 = vcmask 1043456
        %v512 = vsel %vm510, %v505, 0
        %514 = vmatprep.subr.bf16.mxu0 0
        %515 = vmatpush1.bf16.msra.mxu0 %v512
        %516 = vmatprep.subr.bf16.mxu0 0
        %517 = vmatpush1.bf16.msra.mxu0 0
        %518 = vmatprep.subr.bf16.mxu0 0
        %519 = vmatpush1.bf16.msra.mxu0 0
        %520 = vmatprep.subr.bf16.mxu0 0
        %521 = vmatpush1.bf16.msra.mxu0 0
        %522 = vmatprep.subr.bf16.mxu0 0
        %523 = vmatpush1.bf16.msra.mxu0 0
        %524 = vmatprep.subr.bf16.mxu0 0
        %525 = vmatpush1.bf16.msra.mxu0 0
        %526 = vmatprep.subr.bf16.mxu0 0
        %527 = vmatpush1.bf16.msra.mxu0 0
        %528 = vmatprep.subr.bf16.mxu0 0
        %529 = vmatpush1.bf16.msra.mxu0 0
        %530 = vmatprep.subr.bf16.mxu0 0
        %531 = vmatpush1.bf16.msra.mxu0 0
        %532 = vmatprep.subr.bf16.mxu0 0
        %533 = vmatpush1.bf16.msra.mxu0 0
        %534 = vmatprep.subr.bf16.mxu0 0
        %535 = vmatpush1.bf16.msra.mxu0 0
        %536 = vmatprep.subr.bf16.mxu0 0
        %537 = vmatpush1.bf16.msra.mxu0 0
        %538 = vmatprep.subr.bf16.mxu0 0
        %539 = vmatpush1.bf16.msra.mxu0 0
        %540 = vmatprep.subr.bf16.mxu0 0
        %541 = vmatpush1.bf16.msra.mxu0 0
        %542 = vmatprep.subr.bf16.mxu0 0
        %543 = vmatpush1.bf16.msra.mxu0 0
        %544 = vmatprep.subr.bf16.mxu0 0
        %545 = vmatpush1.bf16.msra.mxu0 0
        %546 = vmatprep.mubr.bf16.mxu0 0
        %547 = vmatmul.mubr.bf16.gmra.mrb[0].mxu0 %v508
        %v548 = vpop.f32.mrb[0].mxu0
        %v549 = vadd.f32 %v468, %v548
        %v550 = vpop.f32.mrb[0].mxu0
        %v551 = vpop.f32.mrb[0].mxu0
        %v552 = vpop.f32.mrb[0].mxu0
        %553 = vdwg.mxu0
        %v554 = vmul.f32 %v549, %v549
        %v555 = vmul.f32 %v549, %v554
        %v556 = vmul.f32 %v555, 0.044715
        %v557 = vadd.f32 %v549, %v556
        %v558 = vmul.f32 %v557, 0.7978846
        %v559 = vtanh.pop %v558
        %v560 = vadd.f32 %v559, 1.0
        %v561 = vmul.f32 %v560, 0.5
        %v562 = vmul.f32 %v549, %v561
        %v563 = vpack.c.bf16 %v562, %v562
        %v565 = vsel %vm506, %v451, 0
        %v568 = vsel %vm510, %v563, 0
        %570 = vmatprep.subr.bf16.mxu0 0
        %571 = vmatpush1.bf16.msra.mxu0 %v568
        %572 = vmatprep.subr.bf16.mxu0 0
        %573 = vmatpush1.bf16.msra.mxu0 0
        %574 = vmatprep.subr.bf16.mxu0 0
        %575 = vmatpush1.bf16.msra.mxu0 0
        %576 = vmatprep.subr.bf16.mxu0 0
        %577 = vmatpush1.bf16.msra.mxu0 0
        %578 = vmatprep.subr.bf16.mxu0 0
        %579 = vmatpush1.bf16.msra.mxu0 0
        %580 = vmatprep.subr.bf16.mxu0 0
        %581 = vmatpush1.bf16.msra.mxu0 0
        %582 = vmatprep.subr.bf16.mxu0 0
        %583 = vmatpush1.bf16.msra.mxu0 0
        %584 = vmatprep.subr.bf16.mxu0 0
        %585 = vmatpush1.bf16.msra.mxu0 0
        %586 = vmatprep.subr.bf16.mxu0 0
        %587 = vmatpush1.bf16.msra.mxu0 0
        %588 = vmatprep.subr.bf16.mxu0 0
        %589 = vmatpush1.bf16.msra.mxu0 0
        %590 = vmatprep.subr.bf16.mxu0 0
        %591 = vmatpush1.bf16.msra.mxu0 0
        %592 = vmatprep.subr.bf16.mxu0 0
        %593 = vmatpush1.bf16.msra.mxu0 0
        %594 = vmatprep.subr.bf16.mxu0 0
        %595 = vmatpush1.bf16.msra.mxu0 0
        %596 = vmatprep.subr.bf16.mxu0 0
        %597 = vmatpush1.bf16.msra.mxu0 0
        %598 = vmatprep.subr.bf16.mxu0 0
        %599 = vmatpush1.bf16.msra.mxu0 0
        %600 = vmatprep.subr.bf16.mxu0 0
        %601 = vmatpush1.bf16.msra.mxu0 0
        %602 = vmatprep.mubr.bf16.mxu0 0
        %603 = vmatmul.mubr.bf16.gmra.mrb[0].mxu0 %v565
        %v604 = vpop.f32.mrb[0].mxu0
        %v605 = vadd.f32 %v474, %v604
        %v606 = vpop.f32.mrb[0].mxu0
        %v607 = vpop.f32.mrb[0].mxu0
        %v608 = vpop.f32.mrb[0].mxu0
        %609 = vdwg.mxu0
        %v610 = vadd.f32 %v605, %v476
        %611 = vst.msk [vmem:[#allocation2] sm:$0xff] %vm477, %v610
        %v612 = vld [vmem:[%s7] sm:$0x1]
        %v613 = vld [vmem:[%s8] sm:$0x1]
        %v614 = vld [vmem:[%s9] sm:$0xf]
        %v615 = vld [vmem:[%s9 + $0x4] sm:$0xf]
        %v616 = vld [vmem:[%s9 + $0x8] sm:$0xf]
        %v617 = vld [vmem:[%s9 + $0xc] sm:$0xf]
        %v618 = vld [vmem:[%s11] sm:$0xf]
        %v619 = vld [vmem:[%s11 + $0x4] sm:$0xf]
        %v620 = vld [vmem:[%s11 + $0x8] sm:$0xf]
        %v621 = vld [vmem:[%s11 + $0xc] sm:$0xf]
        %v622 = vld [vmem:[%s10] sm:$0x1]
        %v623 = vld [vmem:[%s12] sm:$0x1]
        %v624 = vld [vmem:[#allocation2] sm:$0xff]
        %v625 = vsel %vm477, %v624, 0.0
        %626 = vadd.xlane.f32.xlu0 %v625
        %v627 = vpop.xlane.xlu0 %626
        %v628 = vrcp.pop 32.0
        %v629 = vmul.f32 %v627, %v628
        %v630 = vmul.f32 %v624, %v624
        %v631 = vsel %vm477, %v630, 0.0
        %632 = vadd.xlane.f32.xlu0 %v631
        %v633 = vpop.xlane.xlu0 %632
        %v634 = vmul.f32 %v633, %v628
        %v635 = vmul.f32 %v629, %v629
        %v636 = vsub.f32 %v634, %v635
        %v637 = vmax.f32 %v636, 0.0
        %v638 = vsub.f32 %v624, %v629
        %v639 = vadd.f32 %v637, 1e-05
        %v640 = vrsqrt.pop %v639
        %v641 = vmul.f32 %v638, %v640
        %v643 = vlaneseq
        %v644 = vshrl.u32 %v643, 7
        %v645 = vsub.s32 0, %v644
        %v646 = vrot.slane %v612, %v645
        %v648 = vmul.f32 %v641, %v646
        %v650 = vlaneseq
        %v651 = vshrl.u32 %v650, 7
        %v652 = vsub.s32 0, %v651
        %v653 = vrot.slane %v613, %v652
        %v655 = vadd.f32 %v648, %v653
        %v656 = vpack.c.bf16 %v655, %v655
        %v658 = vlaneseq
        %v659 = vshrl.u32 %v658, 7
        %v660 = vsub.s32 0, %v659
        %v661 = vrot.slane %v622, %v660
        %v667 = vunpack.c.l.b16 %v614
        %v668 = vunpack.c.l.b16 %v615
        %v669 = vunpack.c.l.b16 %v616
        %v670 = vunpack.c.l.b16 %v617
        %v671 = vpack.c.b16 %v668, %v667
        %v672 = vpack.c.b16 %v670, %v669
        %v676 = vsel %vm477, %v656, 0
        %678 = vmatprep.subr.bf16.mxu0 0
        %679 = vmatpush1.bf16.msra.mxu0 %v671
        %680 = vmatprep.subr.bf16.mxu0 0
        %681 = vmatpush1.bf16.msra.mxu0 %v672
        %682 = vmatprep.subr.bf16.mxu0 0
        %683 = vmatpush1.bf16.msra.mxu0 0
        %684 = vmatprep.subr.bf16.mxu0 0
        %685 = vmatpush1.bf16.msra.mxu0 0
        %686 = vmatprep.subr.bf16.mxu0 0
        %687 = vmatpush1.bf16.msra.mxu0 0
        %688 = vmatprep.subr.bf16.mxu0 0
        %689 = vmatpush1.bf16.msra.mxu0 0
        %690 = vmatprep.subr.bf16.mxu0 0
        %691 = vmatpush1.bf16.msra.mxu0 0
        %692 = vmatprep.subr.bf16.mxu0 0
        %693 = vmatpush1.bf16.msra.mxu0 0
        %694 = vmatprep.subr.bf16.mxu0 0
        %695 = vmatpush1.bf16.msra.mxu0 0
        %696 = vmatprep.subr.bf16.mxu0 0
        %697 = vmatpush1.bf16.msra.mxu0 0
        %698 = vmatprep.subr.bf16.mxu0 0
        %699 = vmatpush1.bf16.msra.mxu0 0
        %700 = vmatprep.subr.bf16.mxu0 0
        %701 = vmatpush1.bf16.msra.mxu0 0
        %702 = vmatprep.subr.bf16.mxu0 0
        %703 = vmatpush1.bf16.msra.mxu0 0
        %704 = vmatprep.subr.bf16.mxu0 0
        %705 = vmatpush1.bf16.msra.mxu0 0
        %706 = vmatprep.subr.bf16.mxu0 0
        %707 = vmatpush1.bf16.msra.mxu0 0
        %708 = vmatprep.subr.bf16.mxu0 0
        %709 = vmatpush1.bf16.msra.mxu0 0
        %710 = vmatprep.mubr.bf16.mxu0 0
        %711 = vmatmul.mubr.bf16.gmra.mrb[0].mxu0 %v676
        %v712 = vpop.f32.mrb[0].mxu0
        %v713 = vadd.f32 %v661, %v712
        %v714 = vpop.f32.mrb[0].mxu0
        %v715 = vpop.f32.mrb[0].mxu0
        %v716 = vpop.f32.mrb[0].mxu0
        %717 = vdwg.mxu0
        %v718 = vmul.f32 %v713, %v713
        %v719 = vmul.f32 %v713, %v718
        %v720 = vmul.f32 %v719, 0.044715
        %v721 = vadd.f32 %v713, %v720
        %v722 = vmul.f32 %v721, 0.7978846
        %v723 = vtanh.pop %v722
        %v724 = vadd.f32 %v723, 1.0
        %v725 = vmul.f32 %v724, 0.5
        %v726 = vmul.f32 %v713, %v725
        %v727 = vpack.c.bf16 %v726, %v726
        %v729 = vlaneseq
        %v730 = vshrl.u32 %v729, 7
        %v731 = vsub.s32 0, %v730
        %v732 = vrot.slane %v623, %v731
        %v738 = vunpack.c.l.b16 %v618
        %v739 = vunpack.c.l.b16 %v619
        %v740 = vunpack.c.l.b16 %v620
        %v741 = vunpack.c.l.b16 %v621
        %v742 = vpack.c.b16 %v739, %v738
        %v743 = vpack.c.b16 %v741, %v740
        %v747 = vsel %vm477, %v727, 0
        %749 = vmatprep.subr.bf16.mxu0 0
        %750 = vmatpush1.bf16.msra.mxu0 %v742
        %751 = vmatprep.subr.bf16.mxu0 0
        %752 = vmatpush1.bf16.msra.mxu0 %v743
        %753 = vmatprep.subr.bf16.mxu0 0
        %754 = vmatpush1.bf16.msra.mxu0 0
        %755 = vmatprep.subr.bf16.mxu0 0
        %756 = vmatpush1.bf16.msra.mxu0 0
        %757 = vmatprep.subr.bf16.mxu0 0
        %758 = vmatpush1.bf16.msra.mxu0 0
        %759 = vmatprep.subr.bf16.mxu0 0
        %760 = vmatpush1.bf16.msra.mxu0 0
        %761 = vmatprep.subr.bf16.mxu0 0
        %762 = vmatpush1.bf16.msra.mxu0 0
        %763 = vmatprep.subr.bf16.mxu0 0
        %764 = vmatpush1.bf16.msra.mxu0 0
        %765 = vmatprep.subr.bf16.mxu0 0
        %766 = vmatpush1.bf16.msra.mxu0 0
        %767 = vmatprep.subr.bf16.mxu0 0
        %768 = vmatpush1.bf16.msra.mxu0 0
        %769 = vmatprep.subr.bf16.mxu0 0
        %770 = vmatpush1.bf16.msra.mxu0 0
        %771 = vmatprep.subr.bf16.mxu0 0
        %772 = vmatpush1.bf16.msra.mxu0 0
        %773 = vmatprep.subr.bf16.mxu0 0
        %774 = vmatpush1.bf16.msra.mxu0 0
        %775 = vmatprep.subr.bf16.mxu0 0
        %776 = vmatpush1.bf16.msra.mxu0 0
        %777 = vmatprep.subr.bf16.mxu0 0
        %778 = vmatpush1.bf16.msra.mxu0 0
        %779 = vmatprep.subr.bf16.mxu0 0
        %780 = vmatpush1.bf16.msra.mxu0 0
        %781 = vmatprep.mubr.bf16.mxu0 0
        %782 = vmatmul.mubr.bf16.gmra.mrb[0].mxu0 %v747
        %v783 = vpop.f32.mrb[0].mxu0
        %v784 = vadd.f32 %v732, %v783
        %v785 = vpop.f32.mrb[0].mxu0
        %v786 = vpop.f32.mrb[0].mxu0
        %v787 = vpop.f32.mrb[0].mxu0
        %788 = vdwg.mxu0
        %v789 = vadd.f32 %v784, %v624
        %790 = vst.msk [vmem:[%s444] sm:$0xff] %vm477, %v789
        %s791 = sand.u32 %s314, 1
        %s792 = scalar_lea.sflag [#allocation5], %s791
        %s793 = sand.u32 %s314, 1
        %s794 = smul.addr %s793, 8
        %s795 = scalar_lea.vmem [#allocation6], %s794
        // Predicated region
        $region77: #{tpu_custom_call.1} parent=71 // pred_check
          %p796 = pneg %p324
        $region78: #{tpu_custom_call.1} parent=71 // pred_check_branch
          %798 = sbr.rel (%p796) target = $region80
        $region79: #{tpu_custom_call.1} parent=71 // pred_region
          %s800 = ssub.s32 128, 128
          %801 = vsyncadd %s792, %s800
          %s802 = smul.addr %s28, 128
          %s803 = scalar_lea.hbm %s13, %s802
          %s805 = sshll.u32 %s795, 4
          %s806 = int_to_ptr.vmem [resolvable:$true] %s805
          %808 = dma.vmem_to_hbm [thread:$0]  %s806, 128, %s803, %s792
        $region80: #{tpu_custom_call.1} parent=71 // pred_fallthru
          _
      $region72: #{tpu_custom_call.1} parent=5 // pred_fallthru
        _
      %p809 = scmp.le.s32.totalorder 2, %s23
      // Predicated region
      $region81: #{tpu_custom_call.1} parent=5 // pred_check
        %p810 = pneg %p809
      $region82: #{tpu_custom_call.1} parent=5 // pred_check_branch
        %812 = sbr.rel (%p810) target = $region84
      $region83: #{tpu_custom_call.1} parent=5 // pred_region
        %s813 = ssub.s32 %s23, 2
        // Predicated region
        $region85: #{tpu_custom_call.1} parent=83 // pred_check
          %p814 = pneg %p330
        $region86: #{tpu_custom_call.1} parent=83 // pred_check_branch
          %816 = sbr.rel (%p814) target = $region88
        $region87: #{tpu_custom_call.1} parent=83 // pred_region
          %s817 = sand.u32 %s315, 1
          %s818 = scalar_lea.sflag [#allocation5], %s817
          %s819 = sand.u32 %s315, 1
          %s820 = smul.addr %s819, 8
          %s821 = scalar_lea.vmem [#allocation6], %s820
          %822 = dma.done %s818, 128
        $region88: #{tpu_custom_call.1} parent=83 // pred_fallthru
          _
      $region84: #{tpu_custom_call.1} parent=5 // pred_fallthru
        _
    $region6: #{tpu_custom_call.1} parent=1 // loop_footer
      %s27 = sadd.s32 1, %s23
    $region7: #{tpu_custom_call.1} parent=1 // loop_footer_branch
      %22 = sbr.rel target = $region3
    $region8: #{tpu_custom_call.1} parent=1 // loop_exit
      _
    %823 = vsyncpa [#allocation4], 1
    %s824 = scalar_lea.sflag [#allocation4], 1
    %825 = vsyncpa %s824, 1
    %826 = vsyncpa [#allocation5], 1
    %s827 = scalar_lea.sflag [#allocation5], 1
    %828 = vsyncpa %s827, 1

</llo_original>
